<compile_context>
chip_gen: v7x
topology: tpu7x:2x2x1
jax: 0.10.0
libtpu: 0.0.40
codegen_flags: <defaults>
</compile_context>

<pallas_src>
import jax
import jax.numpy as jnp
from jax.experimental import pallas as pl
from jax.experimental.pallas import tpu as pltpu

HALF_IN = 256            # half_in_size
FIRST_HL = 5             # first_HL
NUM_CLASSES = 2
NEG_SLOPE = 0.01         # nn.LeakyReLU default
IN_FEATURES = 2 * HALF_IN

# Fused first-stage weight: (512, 128); the four 256-wide products live in
# 5 lanes each at offsets 0/32/64/96 of a single 128-lane MXU output tile.
P_LANES = 128
OFF_P1, OFF_P2, OFF_P3, OFF_P4 = 0, 32, 64, 96


def _leaky(v):
    # LeakyReLU(negative_slope=0.01) == max(v, 0.01*v) since 0 < slope < 1.
    return jnp.maximum(v, NEG_SLOPE * v)


def _vpu_mm(a, w):
    """(B, K) @ (K, N) with tiny K, N as unrolled broadcast-FMA on the VPU."""
    acc = a[:, 0:1] * w[0:1, :]
    for k in range(1, w.shape[0]):
        acc = acc + a[:, k:k + 1] * w[k:k + 1, :]
    return acc


def spinalnet_kernel(x_ref, wbig_ref,
                     w2b_ref, w3b_ref, w4b_ref,
                     b1_ref, b2_ref, b3_ref, b4_ref,
                     wx_ref, bx_ref,
                     o_ref):
    # One lane-dense MXU matmul computes all four unique 256-wide products.
    p = jnp.dot(x_ref[...], wbig_ref[...], preferred_element_type=jnp.float32)
    p1 = p[:, OFF_P1:OFF_P1 + FIRST_HL]   # xa @ w1
    p2 = p[:, OFF_P2:OFF_P2 + FIRST_HL]   # xb @ w2a
    p3 = p[:, OFF_P3:OFF_P3 + FIRST_HL]   # xa @ w3a  (reused for x3 and x5)
    p4 = p[:, OFF_P4:OFF_P4 + FIRST_HL]   # xb @ w4a  (reused for x4 and x6)

    w2b = w2b_ref[...]
    w3b = w3b_ref[...]
    w4b = w4b_ref[...]
    b1, b2, b3, b4 = b1_ref[...], b2_ref[...], b3_ref[...], b4_ref[...]

    # 5-wide dependency chain on the VPU.
    x1 = _leaky(p1 + b1)
    x2 = _leaky(p2 + _vpu_mm(x1, w2b) + b2)
    x3 = _leaky(p3 + _vpu_mm(x2, w3b) + b3)
    x4 = _leaky(p4 + _vpu_mm(x3, w4b) + b4)
    x5 = _leaky(p3 + _vpu_mm(x4, w3b) + b3)   # fc3 reused, as in the PyTorch forward
    x6 = _leaky(p4 + _vpu_mm(x5, w4b) + b4)   # fc4 reused, as in the PyTorch forward

    # fcx(cat[x1..x6]) = bx + sum_i x_i @ wx[i], done as VPU FMA.
    out = bx_ref[...]
    for i, xi in enumerate((x1, x2, x3, x4, x5, x6)):
        out = out + _vpu_mm(xi, wx_ref[i])    # wx_ref[i]: (5, 2) block on leading axis
    o_ref[...] = out


def _round_up(n, m):
    return (n + m - 1) // m * m


def spinalnet_forward(x, kparams, *, block_rows=1024):
    """x: (B, 512) float32. kparams: packed params from pack_params()."""
    B = x.shape[0]
    tb = _round_up(min(block_rows, _round_up(B, 8)), 8)
    b_pad = _round_up(B, tb)
    if b_pad != B:
        x = jnp.pad(x, ((0, b_pad - B), (0, 0)))

    args = (
        x,
        kparams["wbig"],
        kparams["w2b"], kparams["w3b"], kparams["w4b"],
        kparams["b1"], kparams["b2"], kparams["b3"], kparams["b4"],
        kparams["wx"], kparams["bx"],
    )

    def resident(a):
        shp = a.shape
        return pl.BlockSpec(shp, lambda i, _n=len(shp): (0,) * _n)

    in_specs = [pl.BlockSpec((tb, IN_FEATURES), lambda i: (i, 0))]
    in_specs += [resident(a) for a in args[1:]]

    out = pl.pallas_call(
        spinalnet_kernel,
        out_shape=jax.ShapeDtypeStruct((b_pad, NUM_CLASSES), jnp.float32),
        grid=(b_pad // tb,),
        in_specs=in_specs,
        out_specs=pl.BlockSpec((tb, NUM_CLASSES), lambda i: (i, 0)),
        compiler_params=pltpu.CompilerParams(
            dimension_semantics=("parallel",)),
    )(*args)
    return out[:B]


def init_params(key):
    """Deterministic synthetic init (PyTorch-style U(-1/sqrt(fan_in), 1/sqrt(fan_in)))."""
    def linear(k, fan_in, fan_out):
        kw, kb = jax.random.split(k)
        bound = 1.0 / jnp.sqrt(float(fan_in))
        w = jax.random.uniform(kw, (fan_in, fan_out), jnp.float32, -bound, bound)
        b = jax.random.uniform(kb, (1, fan_out), jnp.float32, -bound, bound)
        return w, b

    keys = jax.random.split(key, 7)
    w1, b1 = linear(keys[0], HALF_IN, FIRST_HL)                 # fc1: 256 -> 5
    w2, b2 = linear(keys[1], HALF_IN + FIRST_HL, FIRST_HL)      # fc2: 261 -> 5
    w3, b3 = linear(keys[2], HALF_IN + FIRST_HL, FIRST_HL)      # fc3: 261 -> 5
    w4, b4 = linear(keys[3], HALF_IN + FIRST_HL, FIRST_HL)      # fc4: 261 -> 5
    # fc5, fc6 exist in __init__ but are never used in forward; not materialized.
    wx, bx = linear(keys[6], FIRST_HL * 6, NUM_CLASSES)         # fcx: 30 -> 2

    return {
        "w1": w1, "b1": b1,
        "w2a": w2[:HALF_IN], "w2b": w2[HALF_IN:], "b2": b2,
        "w3a": w3[:HALF_IN], "w3b": w3[HALF_IN:], "b3": b3,
        "w4a": w4[:HALF_IN], "w4b": w4[HALF_IN:], "b4": b4,
        "wx": wx, "bx": bx,
    }


def pack_params(p):
    """Pack the four unique 256-wide weights into one lane-dense (512, 128) weight."""
    wbig = jnp.zeros((IN_FEATURES, P_LANES), jnp.float32)
    wbig = wbig.at[:HALF_IN, OFF_P1:OFF_P1 + FIRST_HL].set(p["w1"])    # xa rows
    wbig = wbig.at[HALF_IN:, OFF_P2:OFF_P2 + FIRST_HL].set(p["w2a"])   # xb rows
    wbig = wbig.at[:HALF_IN, OFF_P3:OFF_P3 + FIRST_HL].set(p["w3a"])   # xa rows
    wbig = wbig.at[HALF_IN:, OFF_P4:OFF_P4 + FIRST_HL].set(p["w4a"])   # xb rows
    return {
        "wbig": wbig,
        "w2b": p["w2b"], "w3b": p["w3b"], "w4b": p["w4b"],
        "b1": p["b1"], "b2": p["b2"], "b3": p["b3"], "b4": p["b4"],
        "wx": p["wx"].reshape(6, FIRST_HL, NUM_CLASSES),
        "bx": p["bx"],
    }


def reference_forward(x, p):
    """Pure-JAX reference mirroring the PyTorch forward exactly."""
    def lru(v):
        return jnp.where(v > 0, v, NEG_SLOPE * v)
    xa = x[:, :HALF_IN]
    xb = x[:, HALF_IN:2 * HALF_IN]
    x1 = lru(xa @ p["w1"] + p["b1"])
    x2 = lru(jnp.concatenate([xb, x1], 1) @ jnp.concatenate([p["w2a"], p["w2b"]], 0) + p["b2"])
    x3 = lru(jnp.concatenate([xa, x2], 1) @ jnp.concatenate([p["w3a"], p["w3b"]], 0) + p["b3"])
    x4 = lru(jnp.concatenate([xb, x3], 1) @ jnp.concatenate([p["w4a"], p["w4b"]], 0) + p["b4"])
    x5 = lru(jnp.concatenate([xa, x4], 1) @ jnp.concatenate([p["w3a"], p["w3b"]], 0) + p["b3"])
    x6 = lru(jnp.concatenate([xb, x5], 1) @ jnp.concatenate([p["w4a"], p["w4b"]], 0) + p["b4"])
    h = jnp.concatenate([x1, x2, x3, x4, x5, x6], 1)
    return h @ p["wx"] + p["bx"]


if __name__ == "__main__":
    key = jax.random.PRNGKey(0)
    k_x, k_p = jax.random.split(key)

    params = init_params(k_p)
    kparams = pack_params(params)

    # Small deterministic check (B=2).
    B = 2
    x = jax.random.normal(k_x, (B, IN_FEATURES), jnp.float32)   # (2, 512)
    out = jax.block_until_ready(spinalnet_forward(x, kparams))
    ref = reference_forward(x, params)
    assert out.shape == (B, NUM_CLASSES)
    assert jnp.allclose(out, ref, atol=1e-3, rtol=1e-3), (out, ref)

    # Multi-tile batch to exercise grid tiling + tail padding.
    B2 = 300
    x2 = jax.random.normal(jax.random.PRNGKey(1), (B2, IN_FEATURES), jnp.float32)
    out2 = jax.block_until_ready(spinalnet_forward(x2, kparams, block_rows=128))
    ref2 = reference_forward(x2, params)
    assert out2.shape == (B2, NUM_CLASSES)
    assert jnp.allclose(out2, ref2, atol=1e-3, rtol=1e-3)

    print("KERNEL_OK")
</pallas_src>

<mosaic_0001>
module attributes {stable_mosaic.version = 11 : i64} {
  func.func @spinalnet_kernel(%arg0: i32, %arg1: memref<8x512xf32, #tpu.memory_space<vmem>>, %arg2: memref<512x128xf32, #tpu.memory_space<vmem>>, %arg3: memref<5x5xf32, #tpu.memory_space<vmem>>, %arg4: memref<5x5xf32, #tpu.memory_space<vmem>>, %arg5: memref<5x5xf32, #tpu.memory_space<vmem>>, %arg6: memref<1x5xf32, #tpu.memory_space<vmem>>, %arg7: memref<1x5xf32, #tpu.memory_space<vmem>>, %arg8: memref<1x5xf32, #tpu.memory_space<vmem>>, %arg9: memref<1x5xf32, #tpu.memory_space<vmem>>, %arg10: memref<6x5x2xf32, #tpu.memory_space<vmem>>, %arg11: memref<1x2xf32, #tpu.memory_space<vmem>>, %arg12: memref<8x2xf32, #tpu.memory_space<vmem>>) attributes {dimension_semantics = [#tpu.dimension_semantics<parallel>], iteration_bounds = array<i64: 1>, scalar_prefetch = 0 : i64, scratch_operands = 0 : i64, tpu.core_type = #tpu.core_type<tc>, window_params = [{transform_indices = @transform_0, window_bounds = array<i64: 8, 512>}, {pipeline_mode = #tpu.pipeline_mode<synchronous>, transform_indices = @transform_1, window_bounds = array<i64: 512, 128>}, {pipeline_mode = #tpu.pipeline_mode<synchronous>, transform_indices = @transform_2, window_bounds = array<i64: 5, 5>}, {pipeline_mode = #tpu.pipeline_mode<synchronous>, transform_indices = @transform_3, window_bounds = array<i64: 5, 5>}, {pipeline_mode = #tpu.pipeline_mode<synchronous>, transform_indices = @transform_4, window_bounds = array<i64: 5, 5>}, {pipeline_mode = #tpu.pipeline_mode<synchronous>, transform_indices = @transform_5, window_bounds = array<i64: 1, 5>}, {pipeline_mode = #tpu.pipeline_mode<synchronous>, transform_indices = @transform_6, window_bounds = array<i64: 1, 5>}, {pipeline_mode = #tpu.pipeline_mode<synchronous>, transform_indices = @transform_7, window_bounds = array<i64: 1, 5>}, {pipeline_mode = #tpu.pipeline_mode<synchronous>, transform_indices = @transform_8, window_bounds = array<i64: 1, 5>}, {pipeline_mode = #tpu.pipeline_mode<synchronous>, transform_indices = @transform_9, window_bounds = array<i64: 6, 5, 2>}, {pipeline_mode = #tpu.pipeline_mode<synchronous>, transform_indices = @transform_10, window_bounds = array<i64: 1, 2>}, {transform_indices = @transform_11, window_bounds = array<i64: 8, 2>}]} {
    %c0 = arith.constant 0 : index
    %c0_0 = arith.constant 0 : index
    %0 = vector.load %arg1[%c0, %c0_0] : memref<8x512xf32, #tpu.memory_space<vmem>>, vector<8x512xf32>
    %c0_1 = arith.constant 0 : index
    %c0_2 = arith.constant 0 : index
    %1 = vector.load %arg2[%c0_1, %c0_2] : memref<512x128xf32, #tpu.memory_space<vmem>>, vector<512x128xf32>
    %cst = arith.constant dense<0.000000e+00> : vector<8x128xf32>
    %2 = tpu.matmul %0, %1, %cst {dimension_numbers = #tpu.dot_dimension_numbers<[1], [0], [0], [1], [0, 0, 1, 1], [], []>} : vector<8x512xf32>, vector<512x128xf32>, vector<8x128xf32> -> vector<8x128xf32>
    %3 = vector.extract_strided_slice %2 {offsets = [0, 0], sizes = [8, 5], strides = [1, 1]} : vector<8x128xf32> to vector<8x5xf32>
    %4 = vector.extract_strided_slice %2 {offsets = [0, 32], sizes = [8, 5], strides = [1, 1]} : vector<8x128xf32> to vector<8x5xf32>
    %5 = vector.extract_strided_slice %2 {offsets = [0, 64], sizes = [8, 5], strides = [1, 1]} : vector<8x128xf32> to vector<8x5xf32>
    %6 = vector.extract_strided_slice %2 {offsets = [0, 96], sizes = [8, 5], strides = [1, 1]} : vector<8x128xf32> to vector<8x5xf32>
    %c0_3 = arith.constant 0 : index
    %c0_4 = arith.constant 0 : index
    %7 = vector.load %arg3[%c0_3, %c0_4] : memref<5x5xf32, #tpu.memory_space<vmem>>, vector<5x5xf32>
    %c0_5 = arith.constant 0 : index
    %c0_6 = arith.constant 0 : index
    %8 = vector.load %arg4[%c0_5, %c0_6] : memref<5x5xf32, #tpu.memory_space<vmem>>, vector<5x5xf32>
    %c0_7 = arith.constant 0 : index
    %c0_8 = arith.constant 0 : index
    %9 = vector.load %arg5[%c0_7, %c0_8] : memref<5x5xf32, #tpu.memory_space<vmem>>, vector<5x5xf32>
    %c0_9 = arith.constant 0 : index
    %c0_10 = arith.constant 0 : index
    %10 = vector.load %arg6[%c0_9, %c0_10] : memref<1x5xf32, #tpu.memory_space<vmem>>, vector<1x5xf32>
    %c0_11 = arith.constant 0 : index
    %c0_12 = arith.constant 0 : index
    %11 = vector.load %arg7[%c0_11, %c0_12] : memref<1x5xf32, #tpu.memory_space<vmem>>, vector<1x5xf32>
    %c0_13 = arith.constant 0 : index
    %c0_14 = arith.constant 0 : index
    %12 = vector.load %arg8[%c0_13, %c0_14] : memref<1x5xf32, #tpu.memory_space<vmem>>, vector<1x5xf32>
    %c0_15 = arith.constant 0 : index
    %c0_16 = arith.constant 0 : index
    %13 = vector.load %arg9[%c0_15, %c0_16] : memref<1x5xf32, #tpu.memory_space<vmem>>, vector<1x5xf32>
    %14 = vector.broadcast %10 : vector<1x5xf32> to vector<8x5xf32>
    %15 = arith.addf %3, %14 : vector<8x5xf32>
    %cst_17 = arith.constant 0.00999999977 : f32
    %16 = vector.broadcast %cst_17 : f32 to vector<8x5xf32>
    %17 = arith.mulf %16, %15 : vector<8x5xf32>
    %18 = arith.maximumf %15, %17 : vector<8x5xf32>
    %19 = vector.extract_strided_slice %18 {offsets = [0, 0], sizes = [8, 1], strides = [1, 1]} : vector<8x5xf32> to vector<8x1xf32>
    %20 = vector.extract_strided_slice %7 {offsets = [0, 0], sizes = [1, 5], strides = [1, 1]} : vector<5x5xf32> to vector<1x5xf32>
    %21 = vector.broadcast %19 : vector<8x1xf32> to vector<8x5xf32>
    %22 = vector.broadcast %20 : vector<1x5xf32> to vector<8x5xf32>
    %23 = arith.mulf %21, %22 : vector<8x5xf32>
    %24 = vector.extract_strided_slice %18 {offsets = [0, 1], sizes = [8, 1], strides = [1, 1]} : vector<8x5xf32> to vector<8x1xf32>
    %25 = vector.extract_strided_slice %7 {offsets = [1, 0], sizes = [1, 5], strides = [1, 1]} : vector<5x5xf32> to vector<1x5xf32>
    %26 = vector.broadcast %24 : vector<8x1xf32> to vector<8x5xf32>
    %27 = vector.broadcast %25 : vector<1x5xf32> to vector<8x5xf32>
    %28 = arith.mulf %26, %27 : vector<8x5xf32>
    %29 = arith.addf %23, %28 : vector<8x5xf32>
    %30 = vector.extract_strided_slice %18 {offsets = [0, 2], sizes = [8, 1], strides = [1, 1]} : vector<8x5xf32> to vector<8x1xf32>
    %31 = vector.extract_strided_slice %7 {offsets = [2, 0], sizes = [1, 5], strides = [1, 1]} : vector<5x5xf32> to vector<1x5xf32>
    %32 = vector.broadcast %30 : vector<8x1xf32> to vector<8x5xf32>
    %33 = vector.broadcast %31 : vector<1x5xf32> to vector<8x5xf32>
    %34 = arith.mulf %32, %33 : vector<8x5xf32>
    %35 = arith.addf %29, %34 : vector<8x5xf32>
    %36 = vector.extract_strided_slice %18 {offsets = [0, 3], sizes = [8, 1], strides = [1, 1]} : vector<8x5xf32> to vector<8x1xf32>
    %37 = vector.extract_strided_slice %7 {offsets = [3, 0], sizes = [1, 5], strides = [1, 1]} : vector<5x5xf32> to vector<1x5xf32>
    %38 = vector.broadcast %36 : vector<8x1xf32> to vector<8x5xf32>
    %39 = vector.broadcast %37 : vector<1x5xf32> to vector<8x5xf32>
    %40 = arith.mulf %38, %39 : vector<8x5xf32>
    %41 = arith.addf %35, %40 : vector<8x5xf32>
    %42 = vector.extract_strided_slice %18 {offsets = [0, 4], sizes = [8, 1], strides = [1, 1]} : vector<8x5xf32> to vector<8x1xf32>
    %43 = vector.extract_strided_slice %7 {offsets = [4, 0], sizes = [1, 5], strides = [1, 1]} : vector<5x5xf32> to vector<1x5xf32>
    %44 = vector.broadcast %42 : vector<8x1xf32> to vector<8x5xf32>
    %45 = vector.broadcast %43 : vector<1x5xf32> to vector<8x5xf32>
    %46 = arith.mulf %44, %45 : vector<8x5xf32>
    %47 = arith.addf %41, %46 : vector<8x5xf32>
    %48 = arith.addf %4, %47 : vector<8x5xf32>
    %49 = vector.broadcast %11 : vector<1x5xf32> to vector<8x5xf32>
    %50 = arith.addf %48, %49 : vector<8x5xf32>
    %cst_18 = arith.constant 0.00999999977 : f32
    %51 = vector.broadcast %cst_18 : f32 to vector<8x5xf32>
    %52 = arith.mulf %51, %50 : vector<8x5xf32>
    %53 = arith.maximumf %50, %52 : vector<8x5xf32>
    %54 = vector.extract_strided_slice %53 {offsets = [0, 0], sizes = [8, 1], strides = [1, 1]} : vector<8x5xf32> to vector<8x1xf32>
    %55 = vector.extract_strided_slice %8 {offsets = [0, 0], sizes = [1, 5], strides = [1, 1]} : vector<5x5xf32> to vector<1x5xf32>
    %56 = vector.broadcast %54 : vector<8x1xf32> to vector<8x5xf32>
    %57 = vector.broadcast %55 : vector<1x5xf32> to vector<8x5xf32>
    %58 = arith.mulf %56, %57 : vector<8x5xf32>
    %59 = vector.extract_strided_slice %53 {offsets = [0, 1], sizes = [8, 1], strides = [1, 1]} : vector<8x5xf32> to vector<8x1xf32>
    %60 = vector.extract_strided_slice %8 {offsets = [1, 0], sizes = [1, 5], strides = [1, 1]} : vector<5x5xf32> to vector<1x5xf32>
    %61 = vector.broadcast %59 : vector<8x1xf32> to vector<8x5xf32>
    %62 = vector.broadcast %60 : vector<1x5xf32> to vector<8x5xf32>
    %63 = arith.mulf %61, %62 : vector<8x5xf32>
    %64 = arith.addf %58, %63 : vector<8x5xf32>
    %65 = vector.extract_strided_slice %53 {offsets = [0, 2], sizes = [8, 1], strides = [1, 1]} : vector<8x5xf32> to vector<8x1xf32>
    %66 = vector.extract_strided_slice %8 {offsets = [2, 0], sizes = [1, 5], strides = [1, 1]} : vector<5x5xf32> to vector<1x5xf32>
    %67 = vector.broadcast %65 : vector<8x1xf32> to vector<8x5xf32>
    %68 = vector.broadcast %66 : vector<1x5xf32> to vector<8x5xf32>
    %69 = arith.mulf %67, %68 : vector<8x5xf32>
    %70 = arith.addf %64, %69 : vector<8x5xf32>
    %71 = vector.extract_strided_slice %53 {offsets = [0, 3], sizes = [8, 1], strides = [1, 1]} : vector<8x5xf32> to vector<8x1xf32>
    %72 = vector.extract_strided_slice %8 {offsets = [3, 0], sizes = [1, 5], strides = [1, 1]} : vector<5x5xf32> to vector<1x5xf32>
    %73 = vector.broadcast %71 : vector<8x1xf32> to vector<8x5xf32>
    %74 = vector.broadcast %72 : vector<1x5xf32> to vector<8x5xf32>
    %75 = arith.mulf %73, %74 : vector<8x5xf32>
    %76 = arith.addf %70, %75 : vector<8x5xf32>
    %77 = vector.extract_strided_slice %53 {offsets = [0, 4], sizes = [8, 1], strides = [1, 1]} : vector<8x5xf32> to vector<8x1xf32>
    %78 = vector.extract_strided_slice %8 {offsets = [4, 0], sizes = [1, 5], strides = [1, 1]} : vector<5x5xf32> to vector<1x5xf32>
    %79 = vector.broadcast %77 : vector<8x1xf32> to vector<8x5xf32>
    %80 = vector.broadcast %78 : vector<1x5xf32> to vector<8x5xf32>
    %81 = arith.mulf %79, %80 : vector<8x5xf32>
    %82 = arith.addf %76, %81 : vector<8x5xf32>
    %83 = arith.addf %5, %82 : vector<8x5xf32>
    %84 = vector.broadcast %12 : vector<1x5xf32> to vector<8x5xf32>
    %85 = arith.addf %83, %84 : vector<8x5xf32>
    %cst_19 = arith.constant 0.00999999977 : f32
    %86 = vector.broadcast %cst_19 : f32 to vector<8x5xf32>
    %87 = arith.mulf %86, %85 : vector<8x5xf32>
    %88 = arith.maximumf %85, %87 : vector<8x5xf32>
    %89 = vector.extract_strided_slice %88 {offsets = [0, 0], sizes = [8, 1], strides = [1, 1]} : vector<8x5xf32> to vector<8x1xf32>
    %90 = vector.extract_strided_slice %9 {offsets = [0, 0], sizes = [1, 5], strides = [1, 1]} : vector<5x5xf32> to vector<1x5xf32>
    %91 = vector.broadcast %89 : vector<8x1xf32> to vector<8x5xf32>
    %92 = vector.broadcast %90 : vector<1x5xf32> to vector<8x5xf32>
    %93 = arith.mulf %91, %92 : vector<8x5xf32>
    %94 = vector.extract_strided_slice %88 {offsets = [0, 1], sizes = [8, 1], strides = [1, 1]} : vector<8x5xf32> to vector<8x1xf32>
    %95 = vector.extract_strided_slice %9 {offsets = [1, 0], sizes = [1, 5], strides = [1, 1]} : vector<5x5xf32> to vector<1x5xf32>
    %96 = vector.broadcast %94 : vector<8x1xf32> to vector<8x5xf32>
    %97 = vector.broadcast %95 : vector<1x5xf32> to vector<8x5xf32>
    %98 = arith.mulf %96, %97 : vector<8x5xf32>
    %99 = arith.addf %93, %98 : vector<8x5xf32>
    %100 = vector.extract_strided_slice %88 {offsets = [0, 2], sizes = [8, 1], strides = [1, 1]} : vector<8x5xf32> to vector<8x1xf32>
    %101 = vector.extract_strided_slice %9 {offsets = [2, 0], sizes = [1, 5], strides = [1, 1]} : vector<5x5xf32> to vector<1x5xf32>
    %102 = vector.broadcast %100 : vector<8x1xf32> to vector<8x5xf32>
    %103 = vector.broadcast %101 : vector<1x5xf32> to vector<8x5xf32>
    %104 = arith.mulf %102, %103 : vector<8x5xf32>
    %105 = arith.addf %99, %104 : vector<8x5xf32>
    %106 = vector.extract_strided_slice %88 {offsets = [0, 3], sizes = [8, 1], strides = [1, 1]} : vector<8x5xf32> to vector<8x1xf32>
    %107 = vector.extract_strided_slice %9 {offsets = [3, 0], sizes = [1, 5], strides = [1, 1]} : vector<5x5xf32> to vector<1x5xf32>
    %108 = vector.broadcast %106 : vector<8x1xf32> to vector<8x5xf32>
    %109 = vector.broadcast %107 : vector<1x5xf32> to vector<8x5xf32>
    %110 = arith.mulf %108, %109 : vector<8x5xf32>
    %111 = arith.addf %105, %110 : vector<8x5xf32>
    %112 = vector.extract_strided_slice %88 {offsets = [0, 4], sizes = [8, 1], strides = [1, 1]} : vector<8x5xf32> to vector<8x1xf32>
    %113 = vector.extract_strided_slice %9 {offsets = [4, 0], sizes = [1, 5], strides = [1, 1]} : vector<5x5xf32> to vector<1x5xf32>
    %114 = vector.broadcast %112 : vector<8x1xf32> to vector<8x5xf32>
    %115 = vector.broadcast %113 : vector<1x5xf32> to vector<8x5xf32>
    %116 = arith.mulf %114, %115 : vector<8x5xf32>
    %117 = arith.addf %111, %116 : vector<8x5xf32>
    %118 = arith.addf %6, %117 : vector<8x5xf32>
    %119 = vector.broadcast %13 : vector<1x5xf32> to vector<8x5xf32>
    %120 = arith.addf %118, %119 : vector<8x5xf32>
    %cst_20 = arith.constant 0.00999999977 : f32
    %121 = vector.broadcast %cst_20 : f32 to vector<8x5xf32>
    %122 = arith.mulf %121, %120 : vector<8x5xf32>
    %123 = arith.maximumf %120, %122 : vector<8x5xf32>
    %124 = vector.extract_strided_slice %123 {offsets = [0, 0], sizes = [8, 1], strides = [1, 1]} : vector<8x5xf32> to vector<8x1xf32>
    %125 = vector.extract_strided_slice %8 {offsets = [0, 0], sizes = [1, 5], strides = [1, 1]} : vector<5x5xf32> to vector<1x5xf32>
    %126 = vector.broadcast %124 : vector<8x1xf32> to vector<8x5xf32>
    %127 = vector.broadcast %125 : vector<1x5xf32> to vector<8x5xf32>
    %128 = arith.mulf %126, %127 : vector<8x5xf32>
    %129 = vector.extract_strided_slice %123 {offsets = [0, 1], sizes = [8, 1], strides = [1, 1]} : vector<8x5xf32> to vector<8x1xf32>
    %130 = vector.extract_strided_slice %8 {offsets = [1, 0], sizes = [1, 5], strides = [1, 1]} : vector<5x5xf32> to vector<1x5xf32>
    %131 = vector.broadcast %129 : vector<8x1xf32> to vector<8x5xf32>
    %132 = vector.broadcast %130 : vector<1x5xf32> to vector<8x5xf32>
    %133 = arith.mulf %131, %132 : vector<8x5xf32>
    %134 = arith.addf %128, %133 : vector<8x5xf32>
    %135 = vector.extract_strided_slice %123 {offsets = [0, 2], sizes = [8, 1], strides = [1, 1]} : vector<8x5xf32> to vector<8x1xf32>
    %136 = vector.extract_strided_slice %8 {offsets = [2, 0], sizes = [1, 5], strides = [1, 1]} : vector<5x5xf32> to vector<1x5xf32>
    %137 = vector.broadcast %135 : vector<8x1xf32> to vector<8x5xf32>
    %138 = vector.broadcast %136 : vector<1x5xf32> to vector<8x5xf32>
    %139 = arith.mulf %137, %138 : vector<8x5xf32>
    %140 = arith.addf %134, %139 : vector<8x5xf32>
    %141 = vector.extract_strided_slice %123 {offsets = [0, 3], sizes = [8, 1], strides = [1, 1]} : vector<8x5xf32> to vector<8x1xf32>
    %142 = vector.extract_strided_slice %8 {offsets = [3, 0], sizes = [1, 5], strides = [1, 1]} : vector<5x5xf32> to vector<1x5xf32>
    %143 = vector.broadcast %141 : vector<8x1xf32> to vector<8x5xf32>
    %144 = vector.broadcast %142 : vector<1x5xf32> to vector<8x5xf32>
    %145 = arith.mulf %143, %144 : vector<8x5xf32>
    %146 = arith.addf %140, %145 : vector<8x5xf32>
    %147 = vector.extract_strided_slice %123 {offsets = [0, 4], sizes = [8, 1], strides = [1, 1]} : vector<8x5xf32> to vector<8x1xf32>
    %148 = vector.extract_strided_slice %8 {offsets = [4, 0], sizes = [1, 5], strides = [1, 1]} : vector<5x5xf32> to vector<1x5xf32>
    %149 = vector.broadcast %147 : vector<8x1xf32> to vector<8x5xf32>
    %150 = vector.broadcast %148 : vector<1x5xf32> to vector<8x5xf32>
    %151 = arith.mulf %149, %150 : vector<8x5xf32>
    %152 = arith.addf %146, %151 : vector<8x5xf32>
    %153 = arith.addf %5, %152 : vector<8x5xf32>
    %154 = vector.broadcast %12 : vector<1x5xf32> to vector<8x5xf32>
    %155 = arith.addf %153, %154 : vector<8x5xf32>
    %cst_21 = arith.constant 0.00999999977 : f32
    %156 = vector.broadcast %cst_21 : f32 to vector<8x5xf32>
    %157 = arith.mulf %156, %155 : vector<8x5xf32>
    %158 = arith.maximumf %155, %157 : vector<8x5xf32>
    %159 = vector.extract_strided_slice %158 {offsets = [0, 0], sizes = [8, 1], strides = [1, 1]} : vector<8x5xf32> to vector<8x1xf32>
    %160 = vector.extract_strided_slice %9 {offsets = [0, 0], sizes = [1, 5], strides = [1, 1]} : vector<5x5xf32> to vector<1x5xf32>
    %161 = vector.broadcast %159 : vector<8x1xf32> to vector<8x5xf32>
    %162 = vector.broadcast %160 : vector<1x5xf32> to vector<8x5xf32>
    %163 = arith.mulf %161, %162 : vector<8x5xf32>
    %164 = vector.extract_strided_slice %158 {offsets = [0, 1], sizes = [8, 1], strides = [1, 1]} : vector<8x5xf32> to vector<8x1xf32>
    %165 = vector.extract_strided_slice %9 {offsets = [1, 0], sizes = [1, 5], strides = [1, 1]} : vector<5x5xf32> to vector<1x5xf32>
    %166 = vector.broadcast %164 : vector<8x1xf32> to vector<8x5xf32>
    %167 = vector.broadcast %165 : vector<1x5xf32> to vector<8x5xf32>
    %168 = arith.mulf %166, %167 : vector<8x5xf32>
    %169 = arith.addf %163, %168 : vector<8x5xf32>
    %170 = vector.extract_strided_slice %158 {offsets = [0, 2], sizes = [8, 1], strides = [1, 1]} : vector<8x5xf32> to vector<8x1xf32>
    %171 = vector.extract_strided_slice %9 {offsets = [2, 0], sizes = [1, 5], strides = [1, 1]} : vector<5x5xf32> to vector<1x5xf32>
    %172 = vector.broadcast %170 : vector<8x1xf32> to vector<8x5xf32>
    %173 = vector.broadcast %171 : vector<1x5xf32> to vector<8x5xf32>
    %174 = arith.mulf %172, %173 : vector<8x5xf32>
    %175 = arith.addf %169, %174 : vector<8x5xf32>
    %176 = vector.extract_strided_slice %158 {offsets = [0, 3], sizes = [8, 1], strides = [1, 1]} : vector<8x5xf32> to vector<8x1xf32>
    %177 = vector.extract_strided_slice %9 {offsets = [3, 0], sizes = [1, 5], strides = [1, 1]} : vector<5x5xf32> to vector<1x5xf32>
    %178 = vector.broadcast %176 : vector<8x1xf32> to vector<8x5xf32>
    %179 = vector.broadcast %177 : vector<1x5xf32> to vector<8x5xf32>
    %180 = arith.mulf %178, %179 : vector<8x5xf32>
    %181 = arith.addf %175, %180 : vector<8x5xf32>
    %182 = vector.extract_strided_slice %158 {offsets = [0, 4], sizes = [8, 1], strides = [1, 1]} : vector<8x5xf32> to vector<8x1xf32>
    %183 = vector.extract_strided_slice %9 {offsets = [4, 0], sizes = [1, 5], strides = [1, 1]} : vector<5x5xf32> to vector<1x5xf32>
    %184 = vector.broadcast %182 : vector<8x1xf32> to vector<8x5xf32>
    %185 = vector.broadcast %183 : vector<1x5xf32> to vector<8x5xf32>
    %186 = arith.mulf %184, %185 : vector<8x5xf32>
    %187 = arith.addf %181, %186 : vector<8x5xf32>
    %188 = arith.addf %6, %187 : vector<8x5xf32>
    %189 = vector.broadcast %13 : vector<1x5xf32> to vector<8x5xf32>
    %190 = arith.addf %188, %189 : vector<8x5xf32>
    %cst_22 = arith.constant 0.00999999977 : f32
    %191 = vector.broadcast %cst_22 : f32 to vector<8x5xf32>
    %192 = arith.mulf %191, %190 : vector<8x5xf32>
    %193 = arith.maximumf %190, %192 : vector<8x5xf32>
    %c0_23 = arith.constant 0 : index
    %c0_24 = arith.constant 0 : index
    %194 = vector.load %arg11[%c0_23, %c0_24] : memref<1x2xf32, #tpu.memory_space<vmem>>, vector<1x2xf32>
    %c0_25 = arith.constant 0 : index
    %c0_26 = arith.constant 0 : index
    %c0_27 = arith.constant 0 : index
    %195 = vector.load %arg10[%c0_25, %c0_26, %c0_27] : memref<6x5x2xf32, #tpu.memory_space<vmem>>, vector<1x5x2xf32>
    %196 = vector.shape_cast %195 : vector<1x5x2xf32> to vector<5x2xf32>
    %197 = vector.extract_strided_slice %18 {offsets = [0, 0], sizes = [8, 1], strides = [1, 1]} : vector<8x5xf32> to vector<8x1xf32>
    %198 = vector.extract_strided_slice %196 {offsets = [0, 0], sizes = [1, 2], strides = [1, 1]} : vector<5x2xf32> to vector<1x2xf32>
    %199 = vector.broadcast %197 : vector<8x1xf32> to vector<8x2xf32>
    %200 = vector.broadcast %198 : vector<1x2xf32> to vector<8x2xf32>
    %201 = arith.mulf %199, %200 : vector<8x2xf32>
    %202 = vector.extract_strided_slice %18 {offsets = [0, 1], sizes = [8, 1], strides = [1, 1]} : vector<8x5xf32> to vector<8x1xf32>
    %203 = vector.extract_strided_slice %196 {offsets = [1, 0], sizes = [1, 2], strides = [1, 1]} : vector<5x2xf32> to vector<1x2xf32>
    %204 = vector.broadcast %202 : vector<8x1xf32> to vector<8x2xf32>
    %205 = vector.broadcast %203 : vector<1x2xf32> to vector<8x2xf32>
    %206 = arith.mulf %204, %205 : vector<8x2xf32>
    %207 = arith.addf %201, %206 : vector<8x2xf32>
    %208 = vector.extract_strided_slice %18 {offsets = [0, 2], sizes = [8, 1], strides = [1, 1]} : vector<8x5xf32> to vector<8x1xf32>
    %209 = vector.extract_strided_slice %196 {offsets = [2, 0], sizes = [1, 2], strides = [1, 1]} : vector<5x2xf32> to vector<1x2xf32>
    %210 = vector.broadcast %208 : vector<8x1xf32> to vector<8x2xf32>
    %211 = vector.broadcast %209 : vector<1x2xf32> to vector<8x2xf32>
    %212 = arith.mulf %210, %211 : vector<8x2xf32>
    %213 = arith.addf %207, %212 : vector<8x2xf32>
    %214 = vector.extract_strided_slice %18 {offsets = [0, 3], sizes = [8, 1], strides = [1, 1]} : vector<8x5xf32> to vector<8x1xf32>
    %215 = vector.extract_strided_slice %196 {offsets = [3, 0], sizes = [1, 2], strides = [1, 1]} : vector<5x2xf32> to vector<1x2xf32>
    %216 = vector.broadcast %214 : vector<8x1xf32> to vector<8x2xf32>
    %217 = vector.broadcast %215 : vector<1x2xf32> to vector<8x2xf32>
    %218 = arith.mulf %216, %217 : vector<8x2xf32>
    %219 = arith.addf %213, %218 : vector<8x2xf32>
    %220 = vector.extract_strided_slice %18 {offsets = [0, 4], sizes = [8, 1], strides = [1, 1]} : vector<8x5xf32> to vector<8x1xf32>
    %221 = vector.extract_strided_slice %196 {offsets = [4, 0], sizes = [1, 2], strides = [1, 1]} : vector<5x2xf32> to vector<1x2xf32>
    %222 = vector.broadcast %220 : vector<8x1xf32> to vector<8x2xf32>
    %223 = vector.broadcast %221 : vector<1x2xf32> to vector<8x2xf32>
    %224 = arith.mulf %222, %223 : vector<8x2xf32>
    %225 = arith.addf %219, %224 : vector<8x2xf32>
    %226 = vector.broadcast %194 : vector<1x2xf32> to vector<8x2xf32>
    %227 = arith.addf %226, %225 : vector<8x2xf32>
    %c1 = arith.constant 1 : index
    %c0_28 = arith.constant 0 : index
    %c0_29 = arith.constant 0 : index
    %228 = vector.load %arg10[%c1, %c0_28, %c0_29] : memref<6x5x2xf32, #tpu.memory_space<vmem>>, vector<1x5x2xf32>
    %229 = vector.shape_cast %228 : vector<1x5x2xf32> to vector<5x2xf32>
    %230 = vector.extract_strided_slice %53 {offsets = [0, 0], sizes = [8, 1], strides = [1, 1]} : vector<8x5xf32> to vector<8x1xf32>
    %231 = vector.extract_strided_slice %229 {offsets = [0, 0], sizes = [1, 2], strides = [1, 1]} : vector<5x2xf32> to vector<1x2xf32>
    %232 = vector.broadcast %230 : vector<8x1xf32> to vector<8x2xf32>
    %233 = vector.broadcast %231 : vector<1x2xf32> to vector<8x2xf32>
    %234 = arith.mulf %232, %233 : vector<8x2xf32>
    %235 = vector.extract_strided_slice %53 {offsets = [0, 1], sizes = [8, 1], strides = [1, 1]} : vector<8x5xf32> to vector<8x1xf32>
    %236 = vector.extract_strided_slice %229 {offsets = [1, 0], sizes = [1, 2], strides = [1, 1]} : vector<5x2xf32> to vector<1x2xf32>
    %237 = vector.broadcast %235 : vector<8x1xf32> to vector<8x2xf32>
    %238 = vector.broadcast %236 : vector<1x2xf32> to vector<8x2xf32>
    %239 = arith.mulf %237, %238 : vector<8x2xf32>
    %240 = arith.addf %234, %239 : vector<8x2xf32>
    %241 = vector.extract_strided_slice %53 {offsets = [0, 2], sizes = [8, 1], strides = [1, 1]} : vector<8x5xf32> to vector<8x1xf32>
    %242 = vector.extract_strided_slice %229 {offsets = [2, 0], sizes = [1, 2], strides = [1, 1]} : vector<5x2xf32> to vector<1x2xf32>
    %243 = vector.broadcast %241 : vector<8x1xf32> to vector<8x2xf32>
    %244 = vector.broadcast %242 : vector<1x2xf32> to vector<8x2xf32>
    %245 = arith.mulf %243, %244 : vector<8x2xf32>
    %246 = arith.addf %240, %245 : vector<8x2xf32>
    %247 = vector.extract_strided_slice %53 {offsets = [0, 3], sizes = [8, 1], strides = [1, 1]} : vector<8x5xf32> to vector<8x1xf32>
    %248 = vector.extract_strided_slice %229 {offsets = [3, 0], sizes = [1, 2], strides = [1, 1]} : vector<5x2xf32> to vector<1x2xf32>
    %249 = vector.broadcast %247 : vector<8x1xf32> to vector<8x2xf32>
    %250 = vector.broadcast %248 : vector<1x2xf32> to vector<8x2xf32>
    %251 = arith.mulf %249, %250 : vector<8x2xf32>
    %252 = arith.addf %246, %251 : vector<8x2xf32>
    %253 = vector.extract_strided_slice %53 {offsets = [0, 4], sizes = [8, 1], strides = [1, 1]} : vector<8x5xf32> to vector<8x1xf32>
    %254 = vector.extract_strided_slice %229 {offsets = [4, 0], sizes = [1, 2], strides = [1, 1]} : vector<5x2xf32> to vector<1x2xf32>
    %255 = vector.broadcast %253 : vector<8x1xf32> to vector<8x2xf32>
    %256 = vector.broadcast %254 : vector<1x2xf32> to vector<8x2xf32>
    %257 = arith.mulf %255, %256 : vector<8x2xf32>
    %258 = arith.addf %252, %257 : vector<8x2xf32>
    %259 = arith.addf %227, %258 : vector<8x2xf32>
    %c2 = arith.constant 2 : index
    %c0_30 = arith.constant 0 : index
    %c0_31 = arith.constant 0 : index
    %260 = vector.load %arg10[%c2, %c0_30, %c0_31] : memref<6x5x2xf32, #tpu.memory_space<vmem>>, vector<1x5x2xf32>
    %261 = vector.shape_cast %260 : vector<1x5x2xf32> to vector<5x2xf32>
    %262 = vector.extract_strided_slice %88 {offsets = [0, 0], sizes = [8, 1], strides = [1, 1]} : vector<8x5xf32> to vector<8x1xf32>
    %263 = vector.extract_strided_slice %261 {offsets = [0, 0], sizes = [1, 2], strides = [1, 1]} : vector<5x2xf32> to vector<1x2xf32>
    %264 = vector.broadcast %262 : vector<8x1xf32> to vector<8x2xf32>
    %265 = vector.broadcast %263 : vector<1x2xf32> to vector<8x2xf32>
    %266 = arith.mulf %264, %265 : vector<8x2xf32>
    %267 = vector.extract_strided_slice %88 {offsets = [0, 1], sizes = [8, 1], strides = [1, 1]} : vector<8x5xf32> to vector<8x1xf32>
    %268 = vector.extract_strided_slice %261 {offsets = [1, 0], sizes = [1, 2], strides = [1, 1]} : vector<5x2xf32> to vector<1x2xf32>
    %269 = vector.broadcast %267 : vector<8x1xf32> to vector<8x2xf32>
    %270 = vector.broadcast %268 : vector<1x2xf32> to vector<8x2xf32>
    %271 = arith.mulf %269, %270 : vector<8x2xf32>
    %272 = arith.addf %266, %271 : vector<8x2xf32>
    %273 = vector.extract_strided_slice %88 {offsets = [0, 2], sizes = [8, 1], strides = [1, 1]} : vector<8x5xf32> to vector<8x1xf32>
    %274 = vector.extract_strided_slice %261 {offsets = [2, 0], sizes = [1, 2], strides = [1, 1]} : vector<5x2xf32> to vector<1x2xf32>
    %275 = vector.broadcast %273 : vector<8x1xf32> to vector<8x2xf32>
    %276 = vector.broadcast %274 : vector<1x2xf32> to vector<8x2xf32>
    %277 = arith.mulf %275, %276 : vector<8x2xf32>
    %278 = arith.addf %272, %277 : vector<8x2xf32>
    %279 = vector.extract_strided_slice %88 {offsets = [0, 3], sizes = [8, 1], strides = [1, 1]} : vector<8x5xf32> to vector<8x1xf32>
    %280 = vector.extract_strided_slice %261 {offsets = [3, 0], sizes = [1, 2], strides = [1, 1]} : vector<5x2xf32> to vector<1x2xf32>
    %281 = vector.broadcast %279 : vector<8x1xf32> to vector<8x2xf32>
    %282 = vector.broadcast %280 : vector<1x2xf32> to vector<8x2xf32>
    %283 = arith.mulf %281, %282 : vector<8x2xf32>
    %284 = arith.addf %278, %283 : vector<8x2xf32>
    %285 = vector.extract_strided_slice %88 {offsets = [0, 4], sizes = [8, 1], strides = [1, 1]} : vector<8x5xf32> to vector<8x1xf32>
    %286 = vector.extract_strided_slice %261 {offsets = [4, 0], sizes = [1, 2], strides = [1, 1]} : vector<5x2xf32> to vector<1x2xf32>
    %287 = vector.broadcast %285 : vector<8x1xf32> to vector<8x2xf32>
    %288 = vector.broadcast %286 : vector<1x2xf32> to vector<8x2xf32>
    %289 = arith.mulf %287, %288 : vector<8x2xf32>
    %290 = arith.addf %284, %289 : vector<8x2xf32>
    %291 = arith.addf %259, %290 : vector<8x2xf32>
    %c3 = arith.constant 3 : index
    %c0_32 = arith.constant 0 : index
    %c0_33 = arith.constant 0 : index
    %292 = vector.load %arg10[%c3, %c0_32, %c0_33] : memref<6x5x2xf32, #tpu.memory_space<vmem>>, vector<1x5x2xf32>
    %293 = vector.shape_cast %292 : vector<1x5x2xf32> to vector<5x2xf32>
    %294 = vector.extract_strided_slice %123 {offsets = [0, 0], sizes = [8, 1], strides = [1, 1]} : vector<8x5xf32> to vector<8x1xf32>
    %295 = vector.extract_strided_slice %293 {offsets = [0, 0], sizes = [1, 2], strides = [1, 1]} : vector<5x2xf32> to vector<1x2xf32>
    %296 = vector.broadcast %294 : vector<8x1xf32> to vector<8x2xf32>
    %297 = vector.broadcast %295 : vector<1x2xf32> to vector<8x2xf32>
    %298 = arith.mulf %296, %297 : vector<8x2xf32>
    %299 = vector.extract_strided_slice %123 {offsets = [0, 1], sizes = [8, 1], strides = [1, 1]} : vector<8x5xf32> to vector<8x1xf32>
    %300 = vector.extract_strided_slice %293 {offsets = [1, 0], sizes = [1, 2], strides = [1, 1]} : vector<5x2xf32> to vector<1x2xf32>
    %301 = vector.broadcast %299 : vector<8x1xf32> to vector<8x2xf32>
    %302 = vector.broadcast %300 : vector<1x2xf32> to vector<8x2xf32>
    %303 = arith.mulf %301, %302 : vector<8x2xf32>
    %304 = arith.addf %298, %303 : vector<8x2xf32>
    %305 = vector.extract_strided_slice %123 {offsets = [0, 2], sizes = [8, 1], strides = [1, 1]} : vector<8x5xf32> to vector<8x1xf32>
    %306 = vector.extract_strided_slice %293 {offsets = [2, 0], sizes = [1, 2], strides = [1, 1]} : vector<5x2xf32> to vector<1x2xf32>
    %307 = vector.broadcast %305 : vector<8x1xf32> to vector<8x2xf32>
    %308 = vector.broadcast %306 : vector<1x2xf32> to vector<8x2xf32>
    %309 = arith.mulf %307, %308 : vector<8x2xf32>
    %310 = arith.addf %304, %309 : vector<8x2xf32>
    %311 = vector.extract_strided_slice %123 {offsets = [0, 3], sizes = [8, 1], strides = [1, 1]} : vector<8x5xf32> to vector<8x1xf32>
    %312 = vector.extract_strided_slice %293 {offsets = [3, 0], sizes = [1, 2], strides = [1, 1]} : vector<5x2xf32> to vector<1x2xf32>
    %313 = vector.broadcast %311 : vector<8x1xf32> to vector<8x2xf32>
    %314 = vector.broadcast %312 : vector<1x2xf32> to vector<8x2xf32>
    %315 = arith.mulf %313, %314 : vector<8x2xf32>
    %316 = arith.addf %310, %315 : vector<8x2xf32>
    %317 = vector.extract_strided_slice %123 {offsets = [0, 4], sizes = [8, 1], strides = [1, 1]} : vector<8x5xf32> to vector<8x1xf32>
    %318 = vector.extract_strided_slice %293 {offsets = [4, 0], sizes = [1, 2], strides = [1, 1]} : vector<5x2xf32> to vector<1x2xf32>
    %319 = vector.broadcast %317 : vector<8x1xf32> to vector<8x2xf32>
    %320 = vector.broadcast %318 : vector<1x2xf32> to vector<8x2xf32>
    %321 = arith.mulf %319, %320 : vector<8x2xf32>
    %322 = arith.addf %316, %321 : vector<8x2xf32>
    %323 = arith.addf %291, %322 : vector<8x2xf32>
    %c4 = arith.constant 4 : index
    %c0_34 = arith.constant 0 : index
    %c0_35 = arith.constant 0 : index
    %324 = vector.load %arg10[%c4, %c0_34, %c0_35] : memref<6x5x2xf32, #tpu.memory_space<vmem>>, vector<1x5x2xf32>
    %325 = vector.shape_cast %324 : vector<1x5x2xf32> to vector<5x2xf32>
    %326 = vector.extract_strided_slice %158 {offsets = [0, 0], sizes = [8, 1], strides = [1, 1]} : vector<8x5xf32> to vector<8x1xf32>
    %327 = vector.extract_strided_slice %325 {offsets = [0, 0], sizes = [1, 2], strides = [1, 1]} : vector<5x2xf32> to vector<1x2xf32>
    %328 = vector.broadcast %326 : vector<8x1xf32> to vector<8x2xf32>
    %329 = vector.broadcast %327 : vector<1x2xf32> to vector<8x2xf32>
    %330 = arith.mulf %328, %329 : vector<8x2xf32>
    %331 = vector.extract_strided_slice %158 {offsets = [0, 1], sizes = [8, 1], strides = [1, 1]} : vector<8x5xf32> to vector<8x1xf32>
    %332 = vector.extract_strided_slice %325 {offsets = [1, 0], sizes = [1, 2], strides = [1, 1]} : vector<5x2xf32> to vector<1x2xf32>
    %333 = vector.broadcast %331 : vector<8x1xf32> to vector<8x2xf32>
    %334 = vector.broadcast %332 : vector<1x2xf32> to vector<8x2xf32>
    %335 = arith.mulf %333, %334 : vector<8x2xf32>
    %336 = arith.addf %330, %335 : vector<8x2xf32>
    %337 = vector.extract_strided_slice %158 {offsets = [0, 2], sizes = [8, 1], strides = [1, 1]} : vector<8x5xf32> to vector<8x1xf32>
    %338 = vector.extract_strided_slice %325 {offsets = [2, 0], sizes = [1, 2], strides = [1, 1]} : vector<5x2xf32> to vector<1x2xf32>
    %339 = vector.broadcast %337 : vector<8x1xf32> to vector<8x2xf32>
    %340 = vector.broadcast %338 : vector<1x2xf32> to vector<8x2xf32>
    %341 = arith.mulf %339, %340 : vector<8x2xf32>
    %342 = arith.addf %336, %341 : vector<8x2xf32>
    %343 = vector.extract_strided_slice %158 {offsets = [0, 3], sizes = [8, 1], strides = [1, 1]} : vector<8x5xf32> to vector<8x1xf32>
    %344 = vector.extract_strided_slice %325 {offsets = [3, 0], sizes = [1, 2], strides = [1, 1]} : vector<5x2xf32> to vector<1x2xf32>
    %345 = vector.broadcast %343 : vector<8x1xf32> to vector<8x2xf32>
    %346 = vector.broadcast %344 : vector<1x2xf32> to vector<8x2xf32>
    %347 = arith.mulf %345, %346 : vector<8x2xf32>
    %348 = arith.addf %342, %347 : vector<8x2xf32>
    %349 = vector.extract_strided_slice %158 {offsets = [0, 4], sizes = [8, 1], strides = [1, 1]} : vector<8x5xf32> to vector<8x1xf32>
    %350 = vector.extract_strided_slice %325 {offsets = [4, 0], sizes = [1, 2], strides = [1, 1]} : vector<5x2xf32> to vector<1x2xf32>
    %351 = vector.broadcast %349 : vector<8x1xf32> to vector<8x2xf32>
    %352 = vector.broadcast %350 : vector<1x2xf32> to vector<8x2xf32>
    %353 = arith.mulf %351, %352 : vector<8x2xf32>
    %354 = arith.addf %348, %353 : vector<8x2xf32>
    %355 = arith.addf %323, %354 : vector<8x2xf32>
    %c5 = arith.constant 5 : index
    %c0_36 = arith.constant 0 : index
    %c0_37 = arith.constant 0 : index
    %356 = vector.load %arg10[%c5, %c0_36, %c0_37] : memref<6x5x2xf32, #tpu.memory_space<vmem>>, vector<1x5x2xf32>
    %357 = vector.shape_cast %356 : vector<1x5x2xf32> to vector<5x2xf32>
    %358 = vector.extract_strided_slice %193 {offsets = [0, 0], sizes = [8, 1], strides = [1, 1]} : vector<8x5xf32> to vector<8x1xf32>
    %359 = vector.extract_strided_slice %357 {offsets = [0, 0], sizes = [1, 2], strides = [1, 1]} : vector<5x2xf32> to vector<1x2xf32>
    %360 = vector.broadcast %358 : vector<8x1xf32> to vector<8x2xf32>
    %361 = vector.broadcast %359 : vector<1x2xf32> to vector<8x2xf32>
    %362 = arith.mulf %360, %361 : vector<8x2xf32>
    %363 = vector.extract_strided_slice %193 {offsets = [0, 1], sizes = [8, 1], strides = [1, 1]} : vector<8x5xf32> to vector<8x1xf32>
    %364 = vector.extract_strided_slice %357 {offsets = [1, 0], sizes = [1, 2], strides = [1, 1]} : vector<5x2xf32> to vector<1x2xf32>
    %365 = vector.broadcast %363 : vector<8x1xf32> to vector<8x2xf32>
    %366 = vector.broadcast %364 : vector<1x2xf32> to vector<8x2xf32>
    %367 = arith.mulf %365, %366 : vector<8x2xf32>
    %368 = arith.addf %362, %367 : vector<8x2xf32>
    %369 = vector.extract_strided_slice %193 {offsets = [0, 2], sizes = [8, 1], strides = [1, 1]} : vector<8x5xf32> to vector<8x1xf32>
    %370 = vector.extract_strided_slice %357 {offsets = [2, 0], sizes = [1, 2], strides = [1, 1]} : vector<5x2xf32> to vector<1x2xf32>
    %371 = vector.broadcast %369 : vector<8x1xf32> to vector<8x2xf32>
    %372 = vector.broadcast %370 : vector<1x2xf32> to vector<8x2xf32>
    %373 = arith.mulf %371, %372 : vector<8x2xf32>
    %374 = arith.addf %368, %373 : vector<8x2xf32>
    %375 = vector.extract_strided_slice %193 {offsets = [0, 3], sizes = [8, 1], strides = [1, 1]} : vector<8x5xf32> to vector<8x1xf32>
    %376 = vector.extract_strided_slice %357 {offsets = [3, 0], sizes = [1, 2], strides = [1, 1]} : vector<5x2xf32> to vector<1x2xf32>
    %377 = vector.broadcast %375 : vector<8x1xf32> to vector<8x2xf32>
    %378 = vector.broadcast %376 : vector<1x2xf32> to vector<8x2xf32>
    %379 = arith.mulf %377, %378 : vector<8x2xf32>
    %380 = arith.addf %374, %379 : vector<8x2xf32>
    %381 = vector.extract_strided_slice %193 {offsets = [0, 4], sizes = [8, 1], strides = [1, 1]} : vector<8x5xf32> to vector<8x1xf32>
    %382 = vector.extract_strided_slice %357 {offsets = [4, 0], sizes = [1, 2], strides = [1, 1]} : vector<5x2xf32> to vector<1x2xf32>
    %383 = vector.broadcast %381 : vector<8x1xf32> to vector<8x2xf32>
    %384 = vector.broadcast %382 : vector<1x2xf32> to vector<8x2xf32>
    %385 = arith.mulf %383, %384 : vector<8x2xf32>
    %386 = arith.addf %380, %385 : vector<8x2xf32>
    %387 = arith.addf %355, %386 : vector<8x2xf32>
    %c0_38 = arith.constant 0 : index
    %c0_39 = arith.constant 0 : index
    %388 = vector.load %arg12[%c0_38, %c0_39] : memref<8x2xf32, #tpu.memory_space<vmem>>, vector<8x2xf32>
    tpu.vector_store %arg12[%c0_38, %c0_39], %387 {strides = array<i32>} : memref<8x2xf32, #tpu.memory_space<vmem>>, vector<8x2xf32>,
    return
  }
  func.func @transform_0(%arg0: i32) -> (i32, i32) {
    %c0_i32 = arith.constant 0 : i32
    %c0_i32_0 = arith.constant 0 : i32
    return %arg0, %c0_i32 : i32, i32
  }
  func.func @transform_1(%arg0: i32) -> (i32, i32) {
    %c0_i32 = arith.constant 0 : i32
    %c0_i32_0 = arith.constant 0 : i32
    %c0_i32_1 = arith.constant 0 : i32
    return %c0_i32, %c0_i32_0 : i32, i32
  }
  func.func @transform_2(%arg0: i32) -> (i32, i32) {
    %c0_i32 = arith.constant 0 : i32
    %c0_i32_0 = arith.constant 0 : i32
    %c0_i32_1 = arith.constant 0 : i32
    return %c0_i32, %c0_i32_0 : i32, i32
  }
  func.func @transform_3(%arg0: i32) -> (i32, i32) {
    %c0_i32 = arith.constant 0 : i32
    %c0_i32_0 = arith.constant 0 : i32
    %c0_i32_1 = arith.constant 0 : i32
    return %c0_i32, %c0_i32_0 : i32, i32
  }
  func.func @transform_4(%arg0: i32) -> (i32, i32) {
    %c0_i32 = arith.constant 0 : i32
    %c0_i32_0 = arith.constant 0 : i32
    %c0_i32_1 = arith.constant 0 : i32
    return %c0_i32, %c0_i32_0 : i32, i32
  }
  func.func @transform_5(%arg0: i32) -> (i32, i32) {
    %c0_i32 = arith.constant 0 : i32
    %c0_i32_0 = arith.constant 0 : i32
    %c0_i32_1 = arith.constant 0 : i32
    return %c0_i32, %c0_i32_0 : i32, i32
  }
  func.func @transform_6(%arg0: i32) -> (i32, i32) {
    %c0_i32 = arith.constant 0 : i32
    %c0_i32_0 = arith.constant 0 : i32
    %c0_i32_1 = arith.constant 0 : i32
    return %c0_i32, %c0_i32_0 : i32, i32
  }
  func.func @transform_7(%arg0: i32) -> (i32, i32) {
    %c0_i32 = arith.constant 0 : i32
    %c0_i32_0 = arith.constant 0 : i32
    %c0_i32_1 = arith.constant 0 : i32
    return %c0_i32, %c0_i32_0 : i32, i32
  }
  func.func @transform_8(%arg0: i32) -> (i32, i32) {
    %c0_i32 = arith.constant 0 : i32
    %c0_i32_0 = arith.constant 0 : i32
    %c0_i32_1 = arith.constant 0 : i32
    return %c0_i32, %c0_i32_0 : i32, i32
  }
  func.func @transform_9(%arg0: i32) -> (i32, i32, i32) {
    %c0_i32 = arith.constant 0 : i32
    %c0_i32_0 = arith.constant 0 : i32
    %c0_i32_1 = arith.constant 0 : i32
    %c0_i32_2 = arith.constant 0 : i32
    return %c0_i32, %c0_i32_0, %c0_i32_1 : i32, i32, i32
  }
  func.func @transform_10(%arg0: i32) -> (i32, i32) {
    %c0_i32 = arith.constant 0 : i32
    %c0_i32_0 = arith.constant 0 : i32
    %c0_i32_1 = arith.constant 0 : i32
    return %c0_i32, %c0_i32_0 : i32, i32
  }
  func.func @transform_11(%arg0: i32) -> (i32, i32) {
    %c0_i32 = arith.constant 0 : i32
    %c0_i32_0 = arith.constant 0 : i32
    return %arg0, %c0_i32 : i32, i32
  }
}

</mosaic_0001>

<llo_original>
// kernel: tpu_custom_call.1
$region0: #{tpu_custom_call.1}
  #allocation0 [shape = 'u32[]', space=smem, size = 0x4, offset = 0x4, fixed_abs, tag = 'smem constant byte address 0x4 - core index']
  #allocation1 [shape = 'u32[144,128]{1,0:T(1,128)}', space=vmem, size = 0x12000, scoped, tag = 'internal scratch']
  %s0 = inlined_call_operand.vmem [shape: f32[8,512], index: 0, kind: input, shape index: {}]
  %s1 = inlined_call_operand.hbm [shape: f32[512,128], index: 1, kind: input, shape index: {}]
  %s2 = inlined_call_operand.vmem [shape: f32[5,5], index: 2, kind: input, shape index: {}]
  %s3 = inlined_call_operand.vmem [shape: f32[5,5], index: 3, kind: input, shape index: {}]
  %s4 = inlined_call_operand.vmem [shape: f32[5,5], index: 4, kind: input, shape index: {}]
  %s5 = inlined_call_operand.vmem [shape: f32[1,5], index: 5, kind: input, shape index: {}]
  %s6 = inlined_call_operand.vmem [shape: f32[1,5], index: 6, kind: input, shape index: {}]
  %s7 = inlined_call_operand.vmem [shape: f32[1,5], index: 7, kind: input, shape index: {}]
  %s8 = inlined_call_operand.vmem [shape: f32[1,5], index: 8, kind: input, shape index: {}]
  %s9 = inlined_call_operand.vmem [shape: f32[6,5,2], index: 9, kind: input, shape index: {}]
  %s10 = inlined_call_operand.vmem [shape: f32[1,2], index: 10, kind: input, shape index: {}]
  %s11 = inlined_call_operand.vmem [shape: f32[8,2], index: 11, kind: output, shape index: {}]
  %s12 = sld [smem:[#allocation0]]
  $region58: #{tpu_custom_call.1} parent=0
    _
  %s14 = ssub.s32 1, %s12
  %s15 = scalar_select 0, %s14, %s12
  $region1: #{tpu_custom_call.1} parent=0
    #allocation2 [shape = 'u8[262144]{0}', space=vmem, size = 0x40000, scoped, tag = 'input window, operand 1, single buffered']
    #allocation3 [shape = 's32[1]{0}', space=sflag, size = 0x4, scoped, tag = 'scoped memory for tpu_custom_call.1']
    %16 = vsyncpa [#allocation3], 0
    // Predicated region
    $region2: #{tpu_custom_call.1} parent=1 // pred_check
      _
    $region3: #{tpu_custom_call.1} parent=1 // pred_check_branch
      %18 = sbr.rel (0) target = $region5
    $region4: #{tpu_custom_call.1} parent=1 // pred_region
      _
    $region5: #{tpu_custom_call.1} parent=1 // pred_fallthru
      _
    // Predicated region
    $region6: #{tpu_custom_call.1} parent=1 // pred_check
      _
    $region7: #{tpu_custom_call.1} parent=1 // pred_check_branch
      %20 = sbr.rel (0) target = $region9
    $region8: #{tpu_custom_call.1} parent=1 // pred_region
      %s22 = ssub.s32 8192, 8192
      %23 = vsyncadd [#allocation3], %s22
      %s24 = sshll.u32 [#allocation2], 4
      %s25 = int_to_ptr.vmem [resolvable:$true] %s24
      %30 = dma.hbm_to_vmem [thread:$0]  %s1, 8192, %s25, [#allocation3], 128, 128, 8
    $region9: #{tpu_custom_call.1} parent=1 // pred_fallthru
      _
    // Predicated region
    $region10: #{tpu_custom_call.1} parent=1 // pred_check
      _
    $region11: #{tpu_custom_call.1} parent=1 // pred_check_branch
      %32 = sbr.rel (0) target = $region13
    $region12: #{tpu_custom_call.1} parent=1 // pred_region
      _
    $region13: #{tpu_custom_call.1} parent=1 // pred_fallthru
      _
    // Predicated region
    $region14: #{tpu_custom_call.1} parent=1 // pred_check
      _
    $region15: #{tpu_custom_call.1} parent=1 // pred_check_branch
      %34 = sbr.rel (0) target = $region17
    $region16: #{tpu_custom_call.1} parent=1 // pred_region
      _
    $region17: #{tpu_custom_call.1} parent=1 // pred_fallthru
      _
    // Predicated region
    $region18: #{tpu_custom_call.1} parent=1 // pred_check
      _
    $region19: #{tpu_custom_call.1} parent=1 // pred_check_branch
      %36 = sbr.rel (0) target = $region21
    $region20: #{tpu_custom_call.1} parent=1 // pred_region
      _
    $region21: #{tpu_custom_call.1} parent=1 // pred_fallthru
      _
    // Predicated region
    $region22: #{tpu_custom_call.1} parent=1 // pred_check
      _
    $region23: #{tpu_custom_call.1} parent=1 // pred_check_branch
      %38 = sbr.rel (0) target = $region25
    $region24: #{tpu_custom_call.1} parent=1 // pred_region
      _
    $region25: #{tpu_custom_call.1} parent=1 // pred_fallthru
      _
    // Predicated region
    $region26: #{tpu_custom_call.1} parent=1 // pred_check
      _
    $region27: #{tpu_custom_call.1} parent=1 // pred_check_branch
      %40 = sbr.rel (0) target = $region29
    $region28: #{tpu_custom_call.1} parent=1 // pred_region
      _
    $region29: #{tpu_custom_call.1} parent=1 // pred_fallthru
      _
    // Predicated region
    $region30: #{tpu_custom_call.1} parent=1 // pred_check
      _
    $region31: #{tpu_custom_call.1} parent=1 // pred_check_branch
      %42 = sbr.rel (0) target = $region33
    $region32: #{tpu_custom_call.1} parent=1 // pred_region
      _
    $region33: #{tpu_custom_call.1} parent=1 // pred_fallthru
      _
    // Predicated region
    $region34: #{tpu_custom_call.1} parent=1 // pred_check
      _
    $region35: #{tpu_custom_call.1} parent=1 // pred_check_branch
      %44 = sbr.rel (0) target = $region37
    $region36: #{tpu_custom_call.1} parent=1 // pred_region
      _
    $region37: #{tpu_custom_call.1} parent=1 // pred_fallthru
      _
    // Predicated region
    $region38: #{tpu_custom_call.1} parent=1 // pred_check
      _
    $region39: #{tpu_custom_call.1} parent=1 // pred_check_branch
      %46 = sbr.rel (0) target = $region41
    $region40: #{tpu_custom_call.1} parent=1 // pred_region
      _
    $region41: #{tpu_custom_call.1} parent=1 // pred_fallthru
      _
    // Predicated region
    $region42: #{tpu_custom_call.1} parent=1 // pred_check
      _
    $region43: #{tpu_custom_call.1} parent=1 // pred_check_branch
      %48 = sbr.rel (0) target = $region45
    $region44: #{tpu_custom_call.1} parent=1 // pred_region
      _
    $region45: #{tpu_custom_call.1} parent=1 // pred_fallthru
      _
    // Predicated region
    $region46: #{tpu_custom_call.1} parent=1 // pred_check
      _
    $region47: #{tpu_custom_call.1} parent=1 // pred_check_branch
      %50 = sbr.rel (0) target = $region49
    $region48: #{tpu_custom_call.1} parent=1 // pred_region
      %51 = dma.done [#allocation3], 8192
    $region49: #{tpu_custom_call.1} parent=1 // pred_fallthru
      _
    %v52 = vld [vmem:[%s0] sm:$0xff]
    %v53 = vld [vmem:[%s0 + $0x8] sm:$0xff]
    %v54 = vld [vmem:[%s0 + $0x10] sm:$0xff]
    %v55 = vld [vmem:[%s0 + $0x18] sm:$0xff]
    %v56 = vld [vmem:[#allocation2] sm:$0xff]
    %v57 = vld [vmem:[#allocation2 + $0x8] sm:$0xff]
    %v58 = vld [vmem:[#allocation2 + $0x10] sm:$0xff]
    %v59 = vld [vmem:[#allocation2 + $0x18] sm:$0xff]
    %v60 = vld [vmem:[#allocation2 + $0x20] sm:$0xff]
    %v61 = vld [vmem:[#allocation2 + $0x28] sm:$0xff]
    %v62 = vld [vmem:[#allocation2 + $0x30] sm:$0xff]
    %v63 = vld [vmem:[#allocation2 + $0x38] sm:$0xff]
    %v64 = vld [vmem:[#allocation2 + $0x40] sm:$0xff]
    %v65 = vld [vmem:[#allocation2 + $0x48] sm:$0xff]
    %v66 = vld [vmem:[#allocation2 + $0x50] sm:$0xff]
    %v67 = vld [vmem:[#allocation2 + $0x58] sm:$0xff]
    %v68 = vld [vmem:[#allocation2 + $0x60] sm:$0xff]
    %v69 = vld [vmem:[#allocation2 + $0x68] sm:$0xff]
    %v70 = vld [vmem:[#allocation2 + $0x70] sm:$0xff]
    %v71 = vld [vmem:[#allocation2 + $0x78] sm:$0xff]
    %v72 = vld [vmem:[#allocation2 + $0x80] sm:$0xff]
    %v73 = vld [vmem:[#allocation2 + $0x88] sm:$0xff]
    %v74 = vld [vmem:[#allocation2 + $0x90] sm:$0xff]
    %v75 = vld [vmem:[#allocation2 + $0x98] sm:$0xff]
    %v76 = vld [vmem:[#allocation2 + $0xa0] sm:$0xff]
    %v77 = vld [vmem:[#allocation2 + $0xa8] sm:$0xff]
    %v78 = vld [vmem:[#allocation2 + $0xb0] sm:$0xff]
    %v79 = vld [vmem:[#allocation2 + $0xb8] sm:$0xff]
    %v80 = vld [vmem:[#allocation2 + $0xc0] sm:$0xff]
    %v81 = vld [vmem:[#allocation2 + $0xc8] sm:$0xff]
    %v82 = vld [vmem:[#allocation2 + $0xd0] sm:$0xff]
    %v83 = vld [vmem:[#allocation2 + $0xd8] sm:$0xff]
    %v84 = vld [vmem:[#allocation2 + $0xe0] sm:$0xff]
    %v85 = vld [vmem:[#allocation2 + $0xe8] sm:$0xff]
    %v86 = vld [vmem:[#allocation2 + $0xf0] sm:$0xff]
    %v87 = vld [vmem:[#allocation2 + $0xf8] sm:$0xff]
    %v88 = vld [vmem:[#allocation2 + $0x100] sm:$0xff]
    %v89 = vld [vmem:[#allocation2 + $0x108] sm:$0xff]
    %v90 = vld [vmem:[#allocation2 + $0x110] sm:$0xff]
    %v91 = vld [vmem:[#allocation2 + $0x118] sm:$0xff]
    %v92 = vld [vmem:[#allocation2 + $0x120] sm:$0xff]
    %v93 = vld [vmem:[#allocation2 + $0x128] sm:$0xff]
    %v94 = vld [vmem:[#allocation2 + $0x130] sm:$0xff]
    %v95 = vld [vmem:[#allocation2 + $0x138] sm:$0xff]
    %v96 = vld [vmem:[#allocation2 + $0x140] sm:$0xff]
    %v97 = vld [vmem:[#allocation2 + $0x148] sm:$0xff]
    %v98 = vld [vmem:[#allocation2 + $0x150] sm:$0xff]
    %v99 = vld [vmem:[#allocation2 + $0x158] sm:$0xff]
    %v100 = vld [vmem:[#allocation2 + $0x160] sm:$0xff]
    %v101 = vld [vmem:[#allocation2 + $0x168] sm:$0xff]
    %v102 = vld [vmem:[#allocation2 + $0x170] sm:$0xff]
    %v103 = vld [vmem:[#allocation2 + $0x178] sm:$0xff]
    %v104 = vld [vmem:[#allocation2 + $0x180] sm:$0xff]
    %v105 = vld [vmem:[#allocation2 + $0x188] sm:$0xff]
    %v106 = vld [vmem:[#allocation2 + $0x190] sm:$0xff]
    %v107 = vld [vmem:[#allocation2 + $0x198] sm:$0xff]
    %v108 = vld [vmem:[#allocation2 + $0x1a0] sm:$0xff]
    %v109 = vld [vmem:[#allocation2 + $0x1a8] sm:$0xff]
    %v110 = vld [vmem:[#allocation2 + $0x1b0] sm:$0xff]
    %v111 = vld [vmem:[#allocation2 + $0x1b8] sm:$0xff]
    %v112 = vld [vmem:[#allocation2 + $0x1c0] sm:$0xff]
    %v113 = vld [vmem:[#allocation2 + $0x1c8] sm:$0xff]
    %v114 = vld [vmem:[#allocation2 + $0x1d0] sm:$0xff]
    %v115 = vld [vmem:[#allocation2 + $0x1d8] sm:$0xff]
    %v116 = vld [vmem:[#allocation2 + $0x1e0] sm:$0xff]
    %v117 = vld [vmem:[#allocation2 + $0x1e8] sm:$0xff]
    %v118 = vld [vmem:[#allocation2 + $0x1f0] sm:$0xff]
    %v119 = vld [vmem:[#allocation2 + $0x1f8] sm:$0xff]
    %120 = vmatprep.subr.mxu0 0.0
    %121 = vmatpush1.msra.mxu0 %v56
    %122 = vmatprep.subr.mxu0 0.0
    %123 = vmatpush1.msra.mxu0 %v57
    %124 = vmatprep.subr.mxu0 0.0
    %125 = vmatpush1.msra.mxu0 %v58
    %126 = vmatprep.subr.mxu0 0.0
    %127 = vmatpush1.msra.mxu0 %v59
    %128 = vmatprep.subr.mxu0 0.0
    %129 = vmatpush1.msra.mxu0 %v60
    %130 = vmatprep.subr.mxu0 0.0
    %131 = vmatpush1.msra.mxu0 %v61
    %132 = vmatprep.subr.mxu0 0.0
    %133 = vmatpush1.msra.mxu0 %v62
    %134 = vmatprep.subr.mxu0 0.0
    %135 = vmatpush1.msra.mxu0 %v63
    %136 = vmatprep.subr.mxu0 0.0
    %137 = vmatpush1.msra.mxu0 %v64
    %138 = vmatprep.subr.mxu0 0.0
    %139 = vmatpush1.msra.mxu0 %v65
    %140 = vmatprep.subr.mxu0 0.0
    %141 = vmatpush1.msra.mxu0 %v66
    %142 = vmatprep.subr.mxu0 0.0
    %143 = vmatpush1.msra.mxu0 %v67
    %144 = vmatprep.subr.mxu0 0.0
    %145 = vmatpush1.msra.mxu0 %v68
    %146 = vmatprep.subr.mxu0 0.0
    %147 = vmatpush1.msra.mxu0 %v69
    %148 = vmatprep.subr.mxu0 0.0
    %149 = vmatpush1.msra.mxu0 %v70
    %150 = vmatprep.subr.mxu0 0.0
    %151 = vmatpush1.msra.mxu0 %v71
    %152 = vmatprep.subr.mxu0 0.0
    %153 = vmatpush1.msra.mxu0 %v72
    %154 = vmatprep.subr.mxu0 0.0
    %155 = vmatpush1.msra.mxu0 %v73
    %156 = vmatprep.subr.mxu0 0.0
    %157 = vmatpush1.msra.mxu0 %v74
    %158 = vmatprep.subr.mxu0 0.0
    %159 = vmatpush1.msra.mxu0 %v75
    %160 = vmatprep.subr.mxu0 0.0
    %161 = vmatpush1.msra.mxu0 %v76
    %162 = vmatprep.subr.mxu0 0.0
    %163 = vmatpush1.msra.mxu0 %v77
    %164 = vmatprep.subr.mxu0 0.0
    %165 = vmatpush1.msra.mxu0 %v78
    %166 = vmatprep.subr.mxu0 0.0
    %167 = vmatpush1.msra.mxu0 %v79
    %168 = vmatprep.subr.mxu0 0.0
    %169 = vmatpush1.msra.mxu0 %v80
    %170 = vmatprep.subr.mxu0 0.0
    %171 = vmatpush1.msra.mxu0 %v81
    %172 = vmatprep.subr.mxu0 0.0
    %173 = vmatpush1.msra.mxu0 %v82
    %174 = vmatprep.subr.mxu0 0.0
    %175 = vmatpush1.msra.mxu0 %v83
    %176 = vmatprep.subr.mxu0 0.0
    %177 = vmatpush1.msra.mxu0 %v84
    %178 = vmatprep.subr.mxu0 0.0
    %179 = vmatpush1.msra.mxu0 %v85
    %180 = vmatprep.subr.mxu0 0.0
    %181 = vmatpush1.msra.mxu0 %v86
    %182 = vmatprep.subr.mxu0 0.0
    %183 = vmatpush1.msra.mxu0 %v87
    %184 = vmatprep.mubr.f32.mxu0 %v53
    %185 = vmatmul.mubr.f32.gmra.mrb[0].mxu0 %v52
    %v186 = vpop.f32.mrb[0].mxu0
    %v187 = vadd.f32 0.0, %v186
    %v188 = vpop.f32.mrb[0].mxu0
    %189 = vdwg.mxu0
    %190 = vmatprep.subr.mxu0 0.0
    %191 = vmatpush1.msra.mxu0 %v88
    %192 = vmatprep.subr.mxu0 0.0
    %193 = vmatpush1.msra.mxu0 %v89
    %194 = vmatprep.subr.mxu0 0.0
    %195 = vmatpush1.msra.mxu0 %v90
    %196 = vmatprep.subr.mxu0 0.0
    %197 = vmatpush1.msra.mxu0 %v91
    %198 = vmatprep.subr.mxu0 0.0
    %199 = vmatpush1.msra.mxu0 %v92
    %200 = vmatprep.subr.mxu0 0.0
    %201 = vmatpush1.msra.mxu0 %v93
    %202 = vmatprep.subr.mxu0 0.0
    %203 = vmatpush1.msra.mxu0 %v94
    %204 = vmatprep.subr.mxu0 0.0
    %205 = vmatpush1.msra.mxu0 %v95
    %206 = vmatprep.subr.mxu0 0.0
    %207 = vmatpush1.msra.mxu0 %v96
    %208 = vmatprep.subr.mxu0 0.0
    %209 = vmatpush1.msra.mxu0 %v97
    %210 = vmatprep.subr.mxu0 0.0
    %211 = vmatpush1.msra.mxu0 %v98
    %212 = vmatprep.subr.mxu0 0.0
    %213 = vmatpush1.msra.mxu0 %v99
    %214 = vmatprep.subr.mxu0 0.0
    %215 = vmatpush1.msra.mxu0 %v100
    %216 = vmatprep.subr.mxu0 0.0
    %217 = vmatpush1.msra.mxu0 %v101
    %218 = vmatprep.subr.mxu0 0.0
    %219 = vmatpush1.msra.mxu0 %v102
    %220 = vmatprep.subr.mxu0 0.0
    %221 = vmatpush1.msra.mxu0 %v103
    %222 = vmatprep.subr.mxu0 0.0
    %223 = vmatpush1.msra.mxu0 %v104
    %224 = vmatprep.subr.mxu0 0.0
    %225 = vmatpush1.msra.mxu0 %v105
    %226 = vmatprep.subr.mxu0 0.0
    %227 = vmatpush1.msra.mxu0 %v106
    %228 = vmatprep.subr.mxu0 0.0
    %229 = vmatpush1.msra.mxu0 %v107
    %230 = vmatprep.subr.mxu0 0.0
    %231 = vmatpush1.msra.mxu0 %v108
    %232 = vmatprep.subr.mxu0 0.0
    %233 = vmatpush1.msra.mxu0 %v109
    %234 = vmatprep.subr.mxu0 0.0
    %235 = vmatpush1.msra.mxu0 %v110
    %236 = vmatprep.subr.mxu0 0.0
    %237 = vmatpush1.msra.mxu0 %v111
    %238 = vmatprep.subr.mxu0 0.0
    %239 = vmatpush1.msra.mxu0 %v112
    %240 = vmatprep.subr.mxu0 0.0
    %241 = vmatpush1.msra.mxu0 %v113
    %242 = vmatprep.subr.mxu0 0.0
    %243 = vmatpush1.msra.mxu0 %v114
    %244 = vmatprep.subr.mxu0 0.0
    %245 = vmatpush1.msra.mxu0 %v115
    %246 = vmatprep.subr.mxu0 0.0
    %247 = vmatpush1.msra.mxu0 %v116
    %248 = vmatprep.subr.mxu0 0.0
    %249 = vmatpush1.msra.mxu0 %v117
    %250 = vmatprep.subr.mxu0 0.0
    %251 = vmatpush1.msra.mxu0 %v118
    %252 = vmatprep.subr.mxu0 0.0
    %253 = vmatpush1.msra.mxu0 %v119
    %254 = vmatprep.mubr.f32.mxu0 %v55
    %255 = vmatmul.mubr.f32.gmra.mrb[0].mxu0 %v54
    %v256 = vpop.f32.mrb[0].mxu0
    %v257 = vadd.f32 %v187, %v256
    %v258 = vpop.f32.mrb[0].mxu0
    %259 = vdwg.mxu0
    %v260 = vld [vmem:[%s2] sm:$0x1f]
    %v261 = vld [vmem:[%s3] sm:$0x1f]
    %v262 = vld [vmem:[%s4] sm:$0x1f]
    %v263 = vld [vmem:[%s5] sm:$0x1]
    %v264 = vld [vmem:[%s6] sm:$0x1]
    %v265 = vld [vmem:[%s7] sm:$0x1]
    %v266 = vld [vmem:[%s8] sm:$0x1]
    %v268 = vlaneseq
    %v269 = vshrl.u32 %v268, 7
    %v270 = vsub.s32 0, %v269
    %v271 = vrot.slane %v263, %v270
    %v273 = vadd.f32 %v257, %v271
    %v274 = vmul.f32 %v273, 0.01
    %v275 = vmax.f32 %v273, %v274
    %277 = vset.pattern.permute.xlu0 0
    %278 = vperm.xlu0 %277, %v275
    %v279 = vpop.permute.xlu0 %278
    %v281 = vlaneseq
    %v282 = vshrl.u32 %v281, 7
    %v283 = vsub.s32 0, %v282
    %v284 = vrot.slane %v260, %v283
    %v285 = vmul.f32 %v279, %v284
    %286 = vset.pattern.permute.xlu0 1
    %287 = vperm.xlu0 %286, %v275
    %v288 = vpop.permute.xlu0 %287
    %v290 = vlaneseq
    %v291 = vshrl.u32 %v290, 7
    %v292 = vsub.s32 1, %v291
    %v293 = vrot.slane %v260, %v292
    %v294 = vmul.f32 %v288, %v293
    %v295 = vadd.f32 %v285, %v294
    %296 = vset.pattern.permute.xlu0 2
    %297 = vperm.xlu0 %296, %v275
    %v298 = vpop.permute.xlu0 %297
    %v300 = vlaneseq
    %v301 = vshrl.u32 %v300, 7
    %v302 = vsub.s32 2, %v301
    %v303 = vrot.slane %v260, %v302
    %v304 = vmul.f32 %v298, %v303
    %v305 = vadd.f32 %v295, %v304
    %306 = vset.pattern.permute.xlu0 3
    %307 = vperm.xlu0 %306, %v275
    %v308 = vpop.permute.xlu0 %307
    %v310 = vlaneseq
    %v311 = vshrl.u32 %v310, 7
    %v312 = vsub.s32 3, %v311
    %v313 = vrot.slane %v260, %v312
    %v314 = vmul.f32 %v308, %v313
    %v315 = vadd.f32 %v305, %v314
    %316 = vset.pattern.permute.xlu0 4
    %317 = vperm.xlu0 %316, %v275
    %v318 = vpop.permute.xlu0 %317
    %v320 = vlaneseq
    %v321 = vshrl.u32 %v320, 7
    %v322 = vsub.s32 4, %v321
    %v323 = vrot.slane %v260, %v322
    %v324 = vmul.f32 %v318, %v323
    %v325 = vadd.f32 %v315, %v324
    %327 = vrot.lane.b32.xlu0 %v325, 32
    %v328 = vpop.permute.xlu0 %327
    %v330 = vadd.f32 %v257, %v328
    %v332 = vlaneseq
    %v333 = vshrl.u32 %v332, 7
    %v334 = vsub.s32 0, %v333
    %v335 = vrot.slane %v264, %v334
    %336 = vrot.lane.b32.xlu0 %v335, 32
    %v337 = vpop.permute.xlu0 %336
    %v339 = vadd.f32 %v330, %v337
    %v340 = vmul.f32 %v339, 0.01
    %v341 = vmax.f32 %v339, %v340
    %343 = vset.pattern.permute.xlu0 32
    %344 = vperm.xlu0 %343, %v341
    %v345 = vpop.permute.xlu0 %344
    %v347 = vlaneseq
    %v348 = vshrl.u32 %v347, 7
    %v349 = vsub.s32 0, %v348
    %v350 = vrot.slane %v261, %v349
    %v351 = vmul.f32 %v345, %v350
    %352 = vset.pattern.permute.xlu0 33
    %353 = vperm.xlu0 %352, %v341
    %v354 = vpop.permute.xlu0 %353
    %v356 = vlaneseq
    %v357 = vshrl.u32 %v356, 7
    %v358 = vsub.s32 1, %v357
    %v359 = vrot.slane %v261, %v358
    %v360 = vmul.f32 %v354, %v359
    %v361 = vadd.f32 %v351, %v360
    %362 = vset.pattern.permute.xlu0 34
    %363 = vperm.xlu0 %362, %v341
    %v364 = vpop.permute.xlu0 %363
    %v366 = vlaneseq
    %v367 = vshrl.u32 %v366, 7
    %v368 = vsub.s32 2, %v367
    %v369 = vrot.slane %v261, %v368
    %v370 = vmul.f32 %v364, %v369
    %v371 = vadd.f32 %v361, %v370
    %372 = vset.pattern.permute.xlu0 35
    %373 = vperm.xlu0 %372, %v341
    %v374 = vpop.permute.xlu0 %373
    %v376 = vlaneseq
    %v377 = vshrl.u32 %v376, 7
    %v378 = vsub.s32 3, %v377
    %v379 = vrot.slane %v261, %v378
    %v380 = vmul.f32 %v374, %v379
    %v381 = vadd.f32 %v371, %v380
    %382 = vset.pattern.permute.xlu0 36
    %383 = vperm.xlu0 %382, %v341
    %v384 = vpop.permute.xlu0 %383
    %v386 = vlaneseq
    %v387 = vshrl.u32 %v386, 7
    %v388 = vsub.s32 4, %v387
    %v389 = vrot.slane %v261, %v388
    %v390 = vmul.f32 %v384, %v389
    %v391 = vadd.f32 %v381, %v390
    %393 = vrot.lane.b32.xlu0 %v391, 64
    %v394 = vpop.permute.xlu0 %393
    %v396 = vadd.f32 %v257, %v394
    %v398 = vlaneseq
    %v399 = vshrl.u32 %v398, 7
    %v400 = vsub.s32 0, %v399
    %v401 = vrot.slane %v265, %v400
    %402 = vrot.lane.b32.xlu0 %v401, 64
    %v403 = vpop.permute.xlu0 %402
    %v405 = vadd.f32 %v396, %v403
    %v406 = vmul.f32 %v405, 0.01
    %v407 = vmax.f32 %v405, %v406
    %409 = vset.pattern.permute.xlu0 64
    %410 = vperm.xlu0 %409, %v407
    %v411 = vpop.permute.xlu0 %410
    %v413 = vlaneseq
    %v414 = vshrl.u32 %v413, 7
    %v415 = vsub.s32 0, %v414
    %v416 = vrot.slane %v262, %v415
    %v417 = vmul.f32 %v411, %v416
    %418 = vset.pattern.permute.xlu0 65
    %419 = vperm.xlu0 %418, %v407
    %v420 = vpop.permute.xlu0 %419
    %v422 = vlaneseq
    %v423 = vshrl.u32 %v422, 7
    %v424 = vsub.s32 1, %v423
    %v425 = vrot.slane %v262, %v424
    %v426 = vmul.f32 %v420, %v425
    %v427 = vadd.f32 %v417, %v426
    %428 = vset.pattern.permute.xlu0 66
    %429 = vperm.xlu0 %428, %v407
    %v430 = vpop.permute.xlu0 %429
    %v432 = vlaneseq
    %v433 = vshrl.u32 %v432, 7
    %v434 = vsub.s32 2, %v433
    %v435 = vrot.slane %v262, %v434
    %v436 = vmul.f32 %v430, %v435
    %v437 = vadd.f32 %v427, %v436
    %438 = vset.pattern.permute.xlu0 67
    %439 = vperm.xlu0 %438, %v407
    %v440 = vpop.permute.xlu0 %439
    %v442 = vlaneseq
    %v443 = vshrl.u32 %v442, 7
    %v444 = vsub.s32 3, %v443
    %v445 = vrot.slane %v262, %v444
    %v446 = vmul.f32 %v440, %v445
    %v447 = vadd.f32 %v437, %v446
    %448 = vset.pattern.permute.xlu0 68
    %449 = vperm.xlu0 %448, %v407
    %v450 = vpop.permute.xlu0 %449
    %v452 = vlaneseq
    %v453 = vshrl.u32 %v452, 7
    %v454 = vsub.s32 4, %v453
    %v455 = vrot.slane %v262, %v454
    %v456 = vmul.f32 %v450, %v455
    %v457 = vadd.f32 %v447, %v456
    %459 = vrot.lane.b32.xlu0 %v457, 96
    %v460 = vpop.permute.xlu0 %459
    %v462 = vadd.f32 %v257, %v460
    %v464 = vlaneseq
    %v465 = vshrl.u32 %v464, 7
    %v466 = vsub.s32 0, %v465
    %v467 = vrot.slane %v266, %v466
    %468 = vrot.lane.b32.xlu0 %v467, 96
    %v469 = vpop.permute.xlu0 %468
    %v471 = vadd.f32 %v462, %v469
    %v472 = vmul.f32 %v471, 0.01
    %v473 = vmax.f32 %v471, %v472
    %475 = vset.pattern.permute.xlu0 96
    %476 = vperm.xlu0 %475, %v473
    %v477 = vpop.permute.xlu0 %476
    %v479 = vmul.f32 %v477, %v350
    %480 = vset.pattern.permute.xlu0 97
    %481 = vperm.xlu0 %480, %v473
    %v482 = vpop.permute.xlu0 %481
    %v484 = vmul.f32 %v482, %v359
    %v485 = vadd.f32 %v479, %v484
    %486 = vset.pattern.permute.xlu0 98
    %487 = vperm.xlu0 %486, %v473
    %v488 = vpop.permute.xlu0 %487
    %v490 = vmul.f32 %v488, %v369
    %v491 = vadd.f32 %v485, %v490
    %492 = vset.pattern.permute.xlu0 99
    %493 = vperm.xlu0 %492, %v473
    %v494 = vpop.permute.xlu0 %493
    %v496 = vmul.f32 %v494, %v379
    %v497 = vadd.f32 %v491, %v496
    %498 = vset.pattern.permute.xlu0 100
    %499 = vperm.xlu0 %498, %v473
    %v500 = vpop.permute.xlu0 %499
    %v502 = vmul.f32 %v500, %v389
    %v503 = vadd.f32 %v497, %v502
    %505 = vrot.lane.b32.xlu0 %v503, 64
    %v506 = vpop.permute.xlu0 %505
    %v508 = vadd.f32 %v257, %v506
    %v509 = vadd.f32 %v508, %v403
    %v510 = vmul.f32 %v509, 0.01
    %v511 = vmax.f32 %v509, %v510
    %513 = vset.pattern.permute.xlu0 64
    %514 = vperm.xlu0 %513, %v511
    %v515 = vpop.permute.xlu0 %514
    %v517 = vmul.f32 %v515, %v416
    %518 = vset.pattern.permute.xlu0 65
    %519 = vperm.xlu0 %518, %v511
    %v520 = vpop.permute.xlu0 %519
    %v522 = vmul.f32 %v520, %v425
    %v523 = vadd.f32 %v517, %v522
    %524 = vset.pattern.permute.xlu0 66
    %525 = vperm.xlu0 %524, %v511
    %v526 = vpop.permute.xlu0 %525
    %v528 = vmul.f32 %v526, %v435
    %v529 = vadd.f32 %v523, %v528
    %530 = vset.pattern.permute.xlu0 67
    %531 = vperm.xlu0 %530, %v511
    %v532 = vpop.permute.xlu0 %531
    %v534 = vmul.f32 %v532, %v445
    %v535 = vadd.f32 %v529, %v534
    %536 = vset.pattern.permute.xlu0 68
    %537 = vperm.xlu0 %536, %v511
    %v538 = vpop.permute.xlu0 %537
    %v540 = vmul.f32 %v538, %v455
    %v541 = vadd.f32 %v535, %v540
    %543 = vrot.lane.b32.xlu0 %v541, 96
    %v544 = vpop.permute.xlu0 %543
    %v546 = vadd.f32 %v257, %v544
    %v547 = vadd.f32 %v546, %v469
    %v548 = vmul.f32 %v547, 0.01
    %v549 = vmax.f32 %v547, %v548
    %v550 = vld [vmem:[%s10] sm:$0x1]
    %v551 = vld [vmem:[%s9] sm:$0x1f]
    %v552 = vlaneseq
    %v553 = vshrl.u32 %v552, 7
    %v554 = vsub.s32 0, %v553
    %v555 = vrot.slane %v551, %v554
    %v556 = vmul.f32 %v279, %v555
    %v557 = vlaneseq
    %v558 = vshrl.u32 %v557, 7
    %v559 = vsub.s32 1, %v558
    %v560 = vrot.slane %v551, %v559
    %v561 = vmul.f32 %v288, %v560
    %v562 = vadd.f32 %v556, %v561
    %v563 = vlaneseq
    %v564 = vshrl.u32 %v563, 7
    %v565 = vsub.s32 2, %v564
    %v566 = vrot.slane %v551, %v565
    %v567 = vmul.f32 %v298, %v566
    %v568 = vadd.f32 %v562, %v567
    %v569 = vlaneseq
    %v570 = vshrl.u32 %v569, 7
    %v571 = vsub.s32 3, %v570
    %v572 = vrot.slane %v551, %v571
    %v573 = vmul.f32 %v308, %v572
    %v574 = vadd.f32 %v568, %v573
    %v575 = vlaneseq
    %v576 = vshrl.u32 %v575, 7
    %v577 = vsub.s32 4, %v576
    %v578 = vrot.slane %v551, %v577
    %v579 = vmul.f32 %v318, %v578
    %v580 = vadd.f32 %v574, %v579
    %v582 = vlaneseq
    %v583 = vshrl.u32 %v582, 7
    %v584 = vsub.s32 0, %v583
    %v585 = vrot.slane %v550, %v584
    %v587 = vadd.f32 %v585, %v580
    %s588 = scalar_lea.vmem %s9, 8
    %v589 = vld [vmem:[%s588] sm:$0x1f]
    %v590 = vlaneseq
    %v591 = vshrl.u32 %v590, 7
    %v592 = vsub.s32 0, %v591
    %v593 = vrot.slane %v589, %v592
    %v594 = vmul.f32 %v345, %v593
    %v595 = vlaneseq
    %v596 = vshrl.u32 %v595, 7
    %v597 = vsub.s32 1, %v596
    %v598 = vrot.slane %v589, %v597
    %v599 = vmul.f32 %v354, %v598
    %v600 = vadd.f32 %v594, %v599
    %v601 = vlaneseq
    %v602 = vshrl.u32 %v601, 7
    %v603 = vsub.s32 2, %v602
    %v604 = vrot.slane %v589, %v603
    %v605 = vmul.f32 %v364, %v604
    %v606 = vadd.f32 %v600, %v605
    %v607 = vlaneseq
    %v608 = vshrl.u32 %v607, 7
    %v609 = vsub.s32 3, %v608
    %v610 = vrot.slane %v589, %v609
    %v611 = vmul.f32 %v374, %v610
    %v612 = vadd.f32 %v606, %v611
    %v613 = vlaneseq
    %v614 = vshrl.u32 %v613, 7
    %v615 = vsub.s32 4, %v614
    %v616 = vrot.slane %v589, %v615
    %v617 = vmul.f32 %v384, %v616
    %v618 = vadd.f32 %v612, %v617
    %v619 = vadd.f32 %v587, %v618
    %s620 = scalar_lea.vmem %s9, 16
    %v621 = vld [vmem:[%s620] sm:$0x1f]
    %v622 = vlaneseq
    %v623 = vshrl.u32 %v622, 7
    %v624 = vsub.s32 0, %v623
    %v625 = vrot.slane %v621, %v624
    %v626 = vmul.f32 %v411, %v625
    %v627 = vlaneseq
    %v628 = vshrl.u32 %v627, 7
    %v629 = vsub.s32 1, %v628
    %v630 = vrot.slane %v621, %v629
    %v631 = vmul.f32 %v420, %v630
    %v632 = vadd.f32 %v626, %v631
    %v633 = vlaneseq
    %v634 = vshrl.u32 %v633, 7
    %v635 = vsub.s32 2, %v634
    %v636 = vrot.slane %v621, %v635
    %v637 = vmul.f32 %v430, %v636
    %v638 = vadd.f32 %v632, %v637
    %v639 = vlaneseq
    %v640 = vshrl.u32 %v639, 7
    %v641 = vsub.s32 3, %v640
    %v642 = vrot.slane %v621, %v641
    %v643 = vmul.f32 %v440, %v642
    %v644 = vadd.f32 %v638, %v643
    %v645 = vlaneseq
    %v646 = vshrl.u32 %v645, 7
    %v647 = vsub.s32 4, %v646
    %v648 = vrot.slane %v621, %v647
    %v649 = vmul.f32 %v450, %v648
    %v650 = vadd.f32 %v644, %v649
    %v651 = vadd.f32 %v619, %v650
    %s652 = scalar_lea.vmem %s9, 24
    %v653 = vld [vmem:[%s652] sm:$0x1f]
    %v654 = vlaneseq
    %v655 = vshrl.u32 %v654, 7
    %v656 = vsub.s32 0, %v655
    %v657 = vrot.slane %v653, %v656
    %v658 = vmul.f32 %v477, %v657
    %v659 = vlaneseq
    %v660 = vshrl.u32 %v659, 7
    %v661 = vsub.s32 1, %v660
    %v662 = vrot.slane %v653, %v661
    %v663 = vmul.f32 %v482, %v662
    %v664 = vadd.f32 %v658, %v663
    %v665 = vlaneseq
    %v666 = vshrl.u32 %v665, 7
    %v667 = vsub.s32 2, %v666
    %v668 = vrot.slane %v653, %v667
    %v669 = vmul.f32 %v488, %v668
    %v670 = vadd.f32 %v664, %v669
    %v671 = vlaneseq
    %v672 = vshrl.u32 %v671, 7
    %v673 = vsub.s32 3, %v672
    %v674 = vrot.slane %v653, %v673
    %v675 = vmul.f32 %v494, %v674
    %v676 = vadd.f32 %v670, %v675
    %v677 = vlaneseq
    %v678 = vshrl.u32 %v677, 7
    %v679 = vsub.s32 4, %v678
    %v680 = vrot.slane %v653, %v679
    %v681 = vmul.f32 %v500, %v680
    %v682 = vadd.f32 %v676, %v681
    %v683 = vadd.f32 %v651, %v682
    %s684 = scalar_lea.vmem %s9, 32
    %v685 = vld [vmem:[%s684] sm:$0x1f]
    %v686 = vlaneseq
    %v687 = vshrl.u32 %v686, 7
    %v688 = vsub.s32 0, %v687
    %v689 = vrot.slane %v685, %v688
    %v690 = vmul.f32 %v515, %v689
    %v691 = vlaneseq
    %v692 = vshrl.u32 %v691, 7
    %v693 = vsub.s32 1, %v692
    %v694 = vrot.slane %v685, %v693
    %v695 = vmul.f32 %v520, %v694
    %v696 = vadd.f32 %v690, %v695
    %v697 = vlaneseq
    %v698 = vshrl.u32 %v697, 7
    %v699 = vsub.s32 2, %v698
    %v700 = vrot.slane %v685, %v699
    %v701 = vmul.f32 %v526, %v700
    %v702 = vadd.f32 %v696, %v701
    %v703 = vlaneseq
    %v704 = vshrl.u32 %v703, 7
    %v705 = vsub.s32 3, %v704
    %v706 = vrot.slane %v685, %v705
    %v707 = vmul.f32 %v532, %v706
    %v708 = vadd.f32 %v702, %v707
    %v709 = vlaneseq
    %v710 = vshrl.u32 %v709, 7
    %v711 = vsub.s32 4, %v710
    %v712 = vrot.slane %v685, %v711
    %v713 = vmul.f32 %v538, %v712
    %v714 = vadd.f32 %v708, %v713
    %v715 = vadd.f32 %v683, %v714
    %s716 = scalar_lea.vmem %s9, 40
    %v717 = vld [vmem:[%s716] sm:$0x1f]
    %719 = vset.pattern.permute.xlu0 96
    %720 = vperm.xlu0 %719, %v549
    %v721 = vpop.permute.xlu0 %720
    %v723 = vlaneseq
    %v724 = vshrl.u32 %v723, 7
    %v725 = vsub.s32 0, %v724
    %v726 = vrot.slane %v717, %v725
    %v727 = vmul.f32 %v721, %v726
    %728 = vset.pattern.permute.xlu0 97
    %729 = vperm.xlu0 %728, %v549
    %v730 = vpop.permute.xlu0 %729
    %v732 = vlaneseq
    %v733 = vshrl.u32 %v732, 7
    %v734 = vsub.s32 1, %v733
    %v735 = vrot.slane %v717, %v734
    %v736 = vmul.f32 %v730, %v735
    %v737 = vadd.f32 %v727, %v736
    %738 = vset.pattern.permute.xlu0 98
    %739 = vperm.xlu0 %738, %v549
    %v740 = vpop.permute.xlu0 %739
    %v742 = vlaneseq
    %v743 = vshrl.u32 %v742, 7
    %v744 = vsub.s32 2, %v743
    %v745 = vrot.slane %v717, %v744
    %v746 = vmul.f32 %v740, %v745
    %v747 = vadd.f32 %v737, %v746
    %748 = vset.pattern.permute.xlu0 99
    %749 = vperm.xlu0 %748, %v549
    %v750 = vpop.permute.xlu0 %749
    %v752 = vlaneseq
    %v753 = vshrl.u32 %v752, 7
    %v754 = vsub.s32 3, %v753
    %v755 = vrot.slane %v717, %v754
    %v756 = vmul.f32 %v750, %v755
    %v757 = vadd.f32 %v747, %v756
    %758 = vset.pattern.permute.xlu0 100
    %759 = vperm.xlu0 %758, %v549
    %v760 = vpop.permute.xlu0 %759
    %v762 = vlaneseq
    %v763 = vshrl.u32 %v762, 7
    %v764 = vsub.s32 4, %v763
    %v765 = vrot.slane %v717, %v764
    %v766 = vmul.f32 %v760, %v765
    %v767 = vadd.f32 %v757, %v766
    %v768 = vadd.f32 %v715, %v767
    %vm769 = vcmask 15360
    %770 = vst.msk [vmem:[%s11] sm:$0xff] %vm769, %v768
    // Predicated region
    $region50: #{tpu_custom_call.1} parent=1 // pred_check
      _
    $region51: #{tpu_custom_call.1} parent=1 // pred_check_branch
      %772 = sbr.rel (0) target = $region53
    $region52: #{tpu_custom_call.1} parent=1 // pred_region
      _
    $region53: #{tpu_custom_call.1} parent=1 // pred_fallthru
      _
    // Predicated region
    $region54: #{tpu_custom_call.1} parent=1 // pred_check
      _
    $region55: #{tpu_custom_call.1} parent=1 // pred_check_branch
      %774 = sbr.rel (0) target = $region57
    $region56: #{tpu_custom_call.1} parent=1 // pred_region
      _
    $region57: #{tpu_custom_call.1} parent=1 // pred_fallthru
      _
    %775 = vsyncpa [#allocation3], 1

</llo_original>
